<compile_context>
chip_gen: v7x
topology: tpu7x:2x2x1
jax: 0.10.0
libtpu: 0.0.40
codegen_flags: <defaults>
</compile_context>

<pallas_src>
import jax
import jax.numpy as jnp
from jax import lax
from jax.experimental import pallas as pl
from jax.experimental.pallas import tpu as pltpu


# ---------------------------------------------------------------------------
# Fused kernel (all levels, one grid step per batch element)
# ---------------------------------------------------------------------------
def _make_fpn_kernel(n_levels):
    n = n_levels
    eps = 1e-5

    def kernel(*refs):
        # ref layout: [x_0..x_{n-1}, mask_0.., w_0.., head_params_0..,
        #              up_0..up_{n-2}, out_0..out_{n-1}]
        x_refs = refs[0:n]
        m_refs = refs[n:2 * n]
        w_refs = refs[2 * n:3 * n]
        hp_refs = refs[3 * n:4 * n]
        up_refs = refs[4 * n:5 * n - 1]
        o_refs = refs[5 * n - 1:6 * n - 1]

        laterals = [None] * n
        # top (coarsest) level first so each level can consume the FINAL
        # lateral of the level above (identical math to the torch loop).
        for i in range(n - 1, -1, -1):
            x = x_refs[i][0].astype(jnp.float32)              # (Cin, T)
            w = w_refs[i][...].astype(jnp.float32)            # (Cout, Cin)
            valid = 1.0 - m_refs[i][0]                        # (1, T); mask: 1.0 = pad

            # 1x1 lateral conv (MXU) + mask
            lat = jnp.dot(w, x, preferred_element_type=jnp.float32) * valid
            # fused top-down nearest-x2 upsample-add (constant 0/1 matrix,
            # resident in VMEM, built once in the wrapper)
            if i < n - 1:
                lat = lat + jnp.dot(laterals[i + 1], up_refs[i][...],
                                    preferred_element_type=jnp.float32)
            laterals[i] = lat                                  # (Cout, T)

            # ---- head: depthwise k=3 conv + bias, mask, channel LayerNorm ----
            hp = hp_refs[i][...]                               # (Cout, 6)
            wd0, wd1, wd2 = hp[:, 0:1], hp[:, 1:2], hp[:, 2:3]
            bd, gam, bet = hp[:, 3:4], hp[:, 4:5], hp[:, 5:6]

            c_out = lat.shape[0]
            zcol = jnp.zeros((c_out, 1), jnp.float32)
            x_prev = jnp.concatenate([zcol, lat[:, :-1]], axis=1)   # x[t-1], 0-pad
            x_next = jnp.concatenate([lat[:, 1:], zcol], axis=1)    # x[t+1], 0-pad
            y = (wd0 * x_prev + wd1 * lat + wd2 * x_next + bd) * valid

            mu = jnp.mean(y, axis=0, keepdims=True)            # LN over channels
            res = y - mu
            sigma = jnp.mean(res * res, axis=0, keepdims=True)
            out = res * lax.rsqrt(sigma + eps) * gam + bet
            o_refs[i][0] = out.astype(o_refs[i].dtype)

    return kernel


# ---------------------------------------------------------------------------
# Wrapper: one pallas_call for the whole FPN
# ---------------------------------------------------------------------------
def fpn1d_forward(inputs, fpn_masks, params, scale=2):
    """FPN1D forward (with_ln=True, integer nearest scale, start_level=0).

    inputs    : list of (B, C_in[i], T_i) float arrays, T_i = scale * T_{i+1}
    fpn_masks : list of (B, T_i) bool arrays (True = padding)
    params    : dict of per-level parameter lists (see __main__)
    Returns (fpn_feats, new_fpn_masks) tuples.
    """
    n = len(inputs)
    batch = inputs[0].shape[0]
    c_out = params["lateral_w"][0].shape[0]
    seq = [int(x.shape[-1]) for x in inputs]
    for i in range(n - 1):
        assert seq[i] == scale * seq[i + 1], (
            "only integer nearest-neighbour scale factors are supported")

    # float padding flag (1.0 = padding); `valid` is derived inside the kernel
    mask_f = [m.astype(jnp.float32)[:, None, :] for m in fpn_masks]

    # pack the four tiny head params into one (C, 6) array per level
    head_p = [jnp.concatenate(
        [params["dw_w"][i].astype(jnp.float32),
         params["dw_b"][i].reshape(-1, 1).astype(jnp.float32),
         params["ln_g"][i].reshape(-1, 1).astype(jnp.float32),
         params["ln_b"][i].reshape(-1, 1).astype(jnp.float32)], axis=1)
        for i in range(n)]

    # nearest-x2 upsample as a 0/1 (Tc, Tf) matrix, built ONCE here
    up_mats = []
    for i in range(n - 1):
        tc, tf = seq[i + 1], seq[i]
        rows = jnp.arange(tc)[:, None]
        cols = jnp.arange(tf)[None, :]
        up_mats.append((rows == cols // scale).astype(jnp.float32))

    args, in_specs = [], []
    for i in range(n):                                   # inputs (batched)
        args.append(inputs[i])
        in_specs.append(pl.BlockSpec((1,) + inputs[i].shape[1:],
                                     lambda b: (b, 0, 0)))
    for i in range(n):                                   # masks (batched)
        args.append(mask_f[i])
        in_specs.append(pl.BlockSpec((1, 1, seq[i]), lambda b: (b, 0, 0)))
    for i in range(n):                                   # lateral weights (const)
        w = params["lateral_w"][i].astype(jnp.float32)
        args.append(w)
        in_specs.append(pl.BlockSpec(w.shape, lambda b: (0, 0)))
    for i in range(n):                                   # packed head params (const)
        args.append(head_p[i])
        in_specs.append(pl.BlockSpec(head_p[i].shape, lambda b: (0, 0)))
    for i in range(n - 1):                               # upsample matrices (const)
        args.append(up_mats[i])
        in_specs.append(pl.BlockSpec(up_mats[i].shape, lambda b: (0, 0)))

    out_shape = tuple(jax.ShapeDtypeStruct((batch, c_out, seq[i]), jnp.float32)
                      for i in range(n))
    out_specs = tuple(pl.BlockSpec((1, c_out, seq[i]), lambda b: (b, 0, 0))
                      for i in range(n))

    feats = pl.pallas_call(
        _make_fpn_kernel(n),
        grid=(batch,),
        in_specs=in_specs,
        out_specs=out_specs,
        out_shape=out_shape,
        compiler_params=pltpu.CompilerParams(
            dimension_semantics=("parallel",)),
    )(*args)
    new_fpn_masks = tuple(fpn_masks)        # stride == 1 -> masks unchanged
    return tuple(feats), new_fpn_masks


# ---------------------------------------------------------------------------
# Pure-JAX reference (mirrors the PyTorch forward exactly)
# ---------------------------------------------------------------------------
def fpn1d_reference(inputs, fpn_masks, params, scale=2):
    n_levels = len(inputs)
    valids = [jnp.where(m, 0.0, 1.0).astype(jnp.float32)[:, None, :]
              for m in fpn_masks]
    laterals = []
    for i in range(n_levels):
        lat = jnp.einsum("oc,bct->bot", params["lateral_w"][i], inputs[i],
                         precision=lax.Precision.HIGHEST)
        laterals.append(lat * valids[i])
    for i in range(n_levels - 1, 0, -1):
        laterals[i - 1] = laterals[i - 1] + jnp.repeat(laterals[i], scale, axis=-1)
    feats = []
    for i in range(n_levels):
        wd = params["dw_w"][i]                          # (C, 3)
        bd = params["dw_b"][i]                          # (C,)
        x = laterals[i]
        xp = jnp.pad(x, ((0, 0), (0, 0), (1, 1)))
        y = (wd[None, :, 0:1] * xp[:, :, 0:-2]
             + wd[None, :, 1:2] * xp[:, :, 1:-1]
             + wd[None, :, 2:3] * xp[:, :, 2:]) + bd[None, :, None]
        y = y * valids[i]
        mu = jnp.mean(y, axis=1, keepdims=True)
        res = y - mu
        sigma = jnp.mean(res * res, axis=1, keepdims=True)
        out = res / jnp.sqrt(sigma + 1e-5)
        out = out * params["ln_g"][i][None, :, None] + params["ln_b"][i][None, :, None]
        feats.append(out)
    return tuple(feats), tuple(fpn_masks)


# ---------------------------------------------------------------------------
if __name__ == "__main__":
    key = jax.random.PRNGKey(0)

    batch = 2
    out_channel = 32
    in_channels = (16, 32, 64)
    seq_lens = (32, 16, 8)                  # T halves per level (scale_factor=2)
    n_levels = len(in_channels)

    kit = iter(jax.random.split(key, 8 * n_levels))
    inputs, masks = [], []
    params = {"lateral_w": [], "dw_w": [], "dw_b": [], "ln_g": [], "ln_b": []}
    for i in range(n_levels):
        t = seq_lens[i]
        inputs.append(jax.random.normal(next(kit), (batch, in_channels[i], t),
                                        dtype=jnp.float32))
        valid_len = jnp.array([t, (3 * t) // 4], dtype=jnp.int32)
        masks.append(jnp.arange(t)[None, :] >= valid_len[:, None])   # True = padding
        params["lateral_w"].append(
            0.2 * jax.random.normal(next(kit), (out_channel, in_channels[i]), jnp.float32))
        params["dw_w"].append(
            0.2 * jax.random.normal(next(kit), (out_channel, 3), jnp.float32))
        params["dw_b"].append(
            0.1 * jax.random.normal(next(kit), (out_channel,), jnp.float32))
        params["ln_g"].append(
            1.0 + 0.1 * jax.random.normal(next(kit), (out_channel,), jnp.float32))
        params["ln_b"].append(
            0.1 * jax.random.normal(next(kit), (out_channel,), jnp.float32))

    feats, new_masks = fpn1d_forward(inputs, masks, params)
    feats = jax.block_until_ready(feats)

    ref_feats, ref_masks = fpn1d_reference(inputs, masks, params)

    ok = True
    for i in range(n_levels):
        ok &= feats[i].shape == ref_feats[i].shape
        ok &= bool(jnp.allclose(feats[i], ref_feats[i], atol=2e-4, rtol=2e-4))
        ok &= bool(jnp.all(new_masks[i] == ref_masks[i]))
    assert ok, "Pallas FPN1D does not match reference"
    print("KERNEL_OK")
</pallas_src>

<mosaic_0001>
module attributes {stable_mosaic.version = 11 : i64} {
  func.func @kernel(%arg0: i32, %arg1: memref<1x16x32xf32, #tpu.memory_space<vmem>>, %arg2: memref<1x32x16xf32, #tpu.memory_space<vmem>>, %arg3: memref<1x64x8xf32, #tpu.memory_space<vmem>>, %arg4: memref<1x1x32xf32, #tpu.memory_space<vmem>>, %arg5: memref<1x1x16xf32, #tpu.memory_space<vmem>>, %arg6: memref<1x1x8xf32, #tpu.memory_space<vmem>>, %arg7: memref<32x16xf32, #tpu.memory_space<vmem>>, %arg8: memref<32x32xf32, #tpu.memory_space<vmem>>, %arg9: memref<32x64xf32, #tpu.memory_space<vmem>>, %arg10: memref<32x6xf32, #tpu.memory_space<vmem>>, %arg11: memref<32x6xf32, #tpu.memory_space<vmem>>, %arg12: memref<32x6xf32, #tpu.memory_space<vmem>>, %arg13: memref<16x32xf32, #tpu.memory_space<vmem>>, %arg14: memref<8x16xf32, #tpu.memory_space<vmem>>, %arg15: memref<1x32x32xf32, #tpu.memory_space<vmem>>, %arg16: memref<1x32x16xf32, #tpu.memory_space<vmem>>, %arg17: memref<1x32x8xf32, #tpu.memory_space<vmem>>) attributes {dimension_semantics = [#tpu.dimension_semantics<parallel>], iteration_bounds = array<i64: 2>, scalar_prefetch = 0 : i64, scratch_operands = 0 : i64, tpu.core_type = #tpu.core_type<tc>, window_params = [{transform_indices = @transform_0, window_bounds = array<i64: 1, 16, 32>}, {transform_indices = @transform_1, window_bounds = array<i64: 1, 32, 16>}, {transform_indices = @transform_2, window_bounds = array<i64: 1, 64, 8>}, {transform_indices = @transform_3, window_bounds = array<i64: 1, 1, 32>}, {transform_indices = @transform_4, window_bounds = array<i64: 1, 1, 16>}, {transform_indices = @transform_5, window_bounds = array<i64: 1, 1, 8>}, {pipeline_mode = #tpu.pipeline_mode<synchronous>, transform_indices = @transform_6, window_bounds = array<i64: 32, 16>}, {pipeline_mode = #tpu.pipeline_mode<synchronous>, transform_indices = @transform_7, window_bounds = array<i64: 32, 32>}, {pipeline_mode = #tpu.pipeline_mode<synchronous>, transform_indices = @transform_8, window_bounds = array<i64: 32, 64>}, {pipeline_mode = #tpu.pipeline_mode<synchronous>, transform_indices = @transform_9, window_bounds = array<i64: 32, 6>}, {pipeline_mode = #tpu.pipeline_mode<synchronous>, transform_indices = @transform_10, window_bounds = array<i64: 32, 6>}, {pipeline_mode = #tpu.pipeline_mode<synchronous>, transform_indices = @transform_11, window_bounds = array<i64: 32, 6>}, {pipeline_mode = #tpu.pipeline_mode<synchronous>, transform_indices = @transform_12, window_bounds = array<i64: 16, 32>}, {pipeline_mode = #tpu.pipeline_mode<synchronous>, transform_indices = @transform_13, window_bounds = array<i64: 8, 16>}, {transform_indices = @transform_14, window_bounds = array<i64: 1, 32, 32>}, {transform_indices = @transform_15, window_bounds = array<i64: 1, 32, 16>}, {transform_indices = @transform_16, window_bounds = array<i64: 1, 32, 8>}]} {
    %c0 = arith.constant 0 : index
    %c0_0 = arith.constant 0 : index
    %c0_1 = arith.constant 0 : index
    %0 = vector.load %arg3[%c0, %c0_0, %c0_1] : memref<1x64x8xf32, #tpu.memory_space<vmem>>, vector<1x64x8xf32>
    %1 = vector.shape_cast %0 : vector<1x64x8xf32> to vector<64x8xf32>
    %c0_2 = arith.constant 0 : index
    %c0_3 = arith.constant 0 : index
    %2 = vector.load %arg9[%c0_2, %c0_3] : memref<32x64xf32, #tpu.memory_space<vmem>>, vector<32x64xf32>
    %c0_4 = arith.constant 0 : index
    %c0_5 = arith.constant 0 : index
    %c0_6 = arith.constant 0 : index
    %3 = vector.load %arg6[%c0_4, %c0_5, %c0_6] : memref<1x1x8xf32, #tpu.memory_space<vmem>>, vector<1x1x8xf32>
    %4 = vector.shape_cast %3 : vector<1x1x8xf32> to vector<1x8xf32>
    %cst = arith.constant 1.000000e+00 : f32
    %5 = vector.broadcast %cst : f32 to vector<1x8xf32>
    %6 = arith.subf %5, %4 : vector<1x8xf32>
    %cst_7 = arith.constant dense<0.000000e+00> : vector<32x8xf32>
    %7 = tpu.matmul %2, %1, %cst_7 {dimension_numbers = #tpu.dot_dimension_numbers<[1], [0], [0], [1], [0, 0, 1, 1], [], []>} : vector<32x64xf32>, vector<64x8xf32>, vector<32x8xf32> -> vector<32x8xf32>
    %8 = vector.broadcast %6 : vector<1x8xf32> to vector<32x8xf32>
    %9 = arith.mulf %7, %8 : vector<32x8xf32>
    %c0_8 = arith.constant 0 : index
    %c0_9 = arith.constant 0 : index
    %10 = vector.load %arg12[%c0_8, %c0_9] : memref<32x6xf32, #tpu.memory_space<vmem>>, vector<32x6xf32>
    %11 = vector.extract_strided_slice %10 {offsets = [0, 0], sizes = [32, 1], strides = [1, 1]} : vector<32x6xf32> to vector<32x1xf32>
    %12 = vector.extract_strided_slice %10 {offsets = [0, 1], sizes = [32, 1], strides = [1, 1]} : vector<32x6xf32> to vector<32x1xf32>
    %13 = vector.extract_strided_slice %10 {offsets = [0, 2], sizes = [32, 1], strides = [1, 1]} : vector<32x6xf32> to vector<32x1xf32>
    %14 = vector.extract_strided_slice %10 {offsets = [0, 3], sizes = [32, 1], strides = [1, 1]} : vector<32x6xf32> to vector<32x1xf32>
    %15 = vector.extract_strided_slice %10 {offsets = [0, 4], sizes = [32, 1], strides = [1, 1]} : vector<32x6xf32> to vector<32x1xf32>
    %16 = vector.extract_strided_slice %10 {offsets = [0, 5], sizes = [32, 1], strides = [1, 1]} : vector<32x6xf32> to vector<32x1xf32>
    %cst_10 = arith.constant 0.000000e+00 : f32
    %17 = vector.broadcast %cst_10 : f32 to vector<32x1xf32>
    %18 = vector.extract_strided_slice %9 {offsets = [0, 0], sizes = [32, 7], strides = [1, 1]} : vector<32x8xf32> to vector<32x7xf32>
    %19 = tpu.concatenate %17, %18 in 1 : vector<32x1xf32>, vector<32x7xf32> -> vector<32x8xf32>
    %20 = vector.extract_strided_slice %9 {offsets = [0, 1], sizes = [32, 7], strides = [1, 1]} : vector<32x8xf32> to vector<32x7xf32>
    %21 = tpu.concatenate %20, %17 in 1 : vector<32x7xf32>, vector<32x1xf32> -> vector<32x8xf32>
    %22 = vector.broadcast %11 : vector<32x1xf32> to vector<32x8xf32>
    %23 = arith.mulf %22, %19 : vector<32x8xf32>
    %24 = vector.broadcast %12 : vector<32x1xf32> to vector<32x8xf32>
    %25 = arith.mulf %24, %9 : vector<32x8xf32>
    %26 = arith.addf %23, %25 : vector<32x8xf32>
    %27 = vector.broadcast %13 : vector<32x1xf32> to vector<32x8xf32>
    %28 = arith.mulf %27, %21 : vector<32x8xf32>
    %29 = arith.addf %26, %28 : vector<32x8xf32>
    %30 = vector.broadcast %14 : vector<32x1xf32> to vector<32x8xf32>
    %31 = arith.addf %29, %30 : vector<32x8xf32>
    %32 = vector.broadcast %6 : vector<1x8xf32> to vector<32x8xf32>
    %33 = arith.mulf %31, %32 : vector<32x8xf32>
    %cst_11 = arith.constant dense<0.000000e+00> : vector<8xf32>
    %34 = vector.multi_reduction <add>, %33, %cst_11 [0] : vector<32x8xf32> to vector<8xf32>
    %35 = vector.shape_cast %34 : vector<8xf32> to vector<1x8xf32>
    %cst_12 = arith.constant 3.200000e+01 : f32
    %36 = vector.broadcast %cst_12 : f32 to vector<1x8xf32>
    %37 = arith.divf %35, %36 : vector<1x8xf32>
    %38 = vector.broadcast %37 : vector<1x8xf32> to vector<32x8xf32>
    %39 = arith.subf %33, %38 : vector<32x8xf32>
    %40 = arith.mulf %39, %39 : vector<32x8xf32>
    %cst_13 = arith.constant dense<0.000000e+00> : vector<8xf32>
    %41 = vector.multi_reduction <add>, %40, %cst_13 [0] : vector<32x8xf32> to vector<8xf32>
    %42 = vector.shape_cast %41 : vector<8xf32> to vector<1x8xf32>
    %cst_14 = arith.constant 3.200000e+01 : f32
    %43 = vector.broadcast %cst_14 : f32 to vector<1x8xf32>
    %44 = arith.divf %42, %43 : vector<1x8xf32>
    %cst_15 = arith.constant 9.99999974E-6 : f32
    %45 = vector.broadcast %cst_15 : f32 to vector<1x8xf32>
    %46 = arith.addf %44, %45 : vector<1x8xf32>
    %47 = math.rsqrt %46 : vector<1x8xf32>
    %48 = vector.broadcast %47 : vector<1x8xf32> to vector<32x8xf32>
    %49 = arith.mulf %39, %48 : vector<32x8xf32>
    %50 = vector.broadcast %15 : vector<32x1xf32> to vector<32x8xf32>
    %51 = arith.mulf %49, %50 : vector<32x8xf32>
    %52 = vector.broadcast %16 : vector<32x1xf32> to vector<32x8xf32>
    %53 = arith.addf %51, %52 : vector<32x8xf32>
    %c0_16 = arith.constant 0 : index
    %c0_17 = arith.constant 0 : index
    %c0_18 = arith.constant 0 : index
    %54 = vector.load %arg17[%c0_16, %c0_17, %c0_18] : memref<1x32x8xf32, #tpu.memory_space<vmem>>, vector<1x32x8xf32>
    %55 = vector.shape_cast %54 : vector<1x32x8xf32> to vector<32x8xf32>
    %56 = vector.shape_cast %53 : vector<32x8xf32> to vector<1x32x8xf32>
    tpu.vector_store %arg17[%c0_16, %c0_17, %c0_18], %56 {strides = array<i32>} : memref<1x32x8xf32, #tpu.memory_space<vmem>>, vector<1x32x8xf32>,
    %c0_19 = arith.constant 0 : index
    %c0_20 = arith.constant 0 : index
    %c0_21 = arith.constant 0 : index
    %57 = vector.load %arg2[%c0_19, %c0_20, %c0_21] : memref<1x32x16xf32, #tpu.memory_space<vmem>>, vector<1x32x16xf32>
    %58 = vector.shape_cast %57 : vector<1x32x16xf32> to vector<32x16xf32>
    %c0_22 = arith.constant 0 : index
    %c0_23 = arith.constant 0 : index
    %59 = vector.load %arg8[%c0_22, %c0_23] : memref<32x32xf32, #tpu.memory_space<vmem>>, vector<32x32xf32>
    %c0_24 = arith.constant 0 : index
    %c0_25 = arith.constant 0 : index
    %c0_26 = arith.constant 0 : index
    %60 = vector.load %arg5[%c0_24, %c0_25, %c0_26] : memref<1x1x16xf32, #tpu.memory_space<vmem>>, vector<1x1x16xf32>
    %61 = vector.shape_cast %60 : vector<1x1x16xf32> to vector<1x16xf32>
    %cst_27 = arith.constant 1.000000e+00 : f32
    %62 = vector.broadcast %cst_27 : f32 to vector<1x16xf32>
    %63 = arith.subf %62, %61 : vector<1x16xf32>
    %cst_28 = arith.constant dense<0.000000e+00> : vector<32x16xf32>
    %64 = tpu.matmul %59, %58, %cst_28 {dimension_numbers = #tpu.dot_dimension_numbers<[1], [0], [0], [1], [0, 0, 1, 1], [], []>} : vector<32x32xf32>, vector<32x16xf32>, vector<32x16xf32> -> vector<32x16xf32>
    %65 = vector.broadcast %63 : vector<1x16xf32> to vector<32x16xf32>
    %66 = arith.mulf %64, %65 : vector<32x16xf32>
    %c0_29 = arith.constant 0 : index
    %c0_30 = arith.constant 0 : index
    %67 = vector.load %arg14[%c0_29, %c0_30] : memref<8x16xf32, #tpu.memory_space<vmem>>, vector<8x16xf32>
    %cst_31 = arith.constant dense<0.000000e+00> : vector<32x16xf32>
    %68 = tpu.matmul %9, %67, %cst_31 {dimension_numbers = #tpu.dot_dimension_numbers<[1], [0], [0], [1], [0, 0, 1, 1], [], []>} : vector<32x8xf32>, vector<8x16xf32>, vector<32x16xf32> -> vector<32x16xf32>
    %69 = arith.addf %66, %68 : vector<32x16xf32>
    %c0_32 = arith.constant 0 : index
    %c0_33 = arith.constant 0 : index
    %70 = vector.load %arg11[%c0_32, %c0_33] : memref<32x6xf32, #tpu.memory_space<vmem>>, vector<32x6xf32>
    %71 = vector.extract_strided_slice %70 {offsets = [0, 0], sizes = [32, 1], strides = [1, 1]} : vector<32x6xf32> to vector<32x1xf32>
    %72 = vector.extract_strided_slice %70 {offsets = [0, 1], sizes = [32, 1], strides = [1, 1]} : vector<32x6xf32> to vector<32x1xf32>
    %73 = vector.extract_strided_slice %70 {offsets = [0, 2], sizes = [32, 1], strides = [1, 1]} : vector<32x6xf32> to vector<32x1xf32>
    %74 = vector.extract_strided_slice %70 {offsets = [0, 3], sizes = [32, 1], strides = [1, 1]} : vector<32x6xf32> to vector<32x1xf32>
    %75 = vector.extract_strided_slice %70 {offsets = [0, 4], sizes = [32, 1], strides = [1, 1]} : vector<32x6xf32> to vector<32x1xf32>
    %76 = vector.extract_strided_slice %70 {offsets = [0, 5], sizes = [32, 1], strides = [1, 1]} : vector<32x6xf32> to vector<32x1xf32>
    %cst_34 = arith.constant 0.000000e+00 : f32
    %77 = vector.broadcast %cst_34 : f32 to vector<32x1xf32>
    %78 = vector.extract_strided_slice %69 {offsets = [0, 0], sizes = [32, 15], strides = [1, 1]} : vector<32x16xf32> to vector<32x15xf32>
    %79 = tpu.concatenate %77, %78 in 1 : vector<32x1xf32>, vector<32x15xf32> -> vector<32x16xf32>
    %80 = vector.extract_strided_slice %69 {offsets = [0, 1], sizes = [32, 15], strides = [1, 1]} : vector<32x16xf32> to vector<32x15xf32>
    %81 = tpu.concatenate %80, %77 in 1 : vector<32x15xf32>, vector<32x1xf32> -> vector<32x16xf32>
    %82 = vector.broadcast %71 : vector<32x1xf32> to vector<32x16xf32>
    %83 = arith.mulf %82, %79 : vector<32x16xf32>
    %84 = vector.broadcast %72 : vector<32x1xf32> to vector<32x16xf32>
    %85 = arith.mulf %84, %69 : vector<32x16xf32>
    %86 = arith.addf %83, %85 : vector<32x16xf32>
    %87 = vector.broadcast %73 : vector<32x1xf32> to vector<32x16xf32>
    %88 = arith.mulf %87, %81 : vector<32x16xf32>
    %89 = arith.addf %86, %88 : vector<32x16xf32>
    %90 = vector.broadcast %74 : vector<32x1xf32> to vector<32x16xf32>
    %91 = arith.addf %89, %90 : vector<32x16xf32>
    %92 = vector.broadcast %63 : vector<1x16xf32> to vector<32x16xf32>
    %93 = arith.mulf %91, %92 : vector<32x16xf32>
    %cst_35 = arith.constant dense<0.000000e+00> : vector<16xf32>
    %94 = vector.multi_reduction <add>, %93, %cst_35 [0] : vector<32x16xf32> to vector<16xf32>
    %95 = vector.shape_cast %94 : vector<16xf32> to vector<1x16xf32>
    %cst_36 = arith.constant 3.200000e+01 : f32
    %96 = vector.broadcast %cst_36 : f32 to vector<1x16xf32>
    %97 = arith.divf %95, %96 : vector<1x16xf32>
    %98 = vector.broadcast %97 : vector<1x16xf32> to vector<32x16xf32>
    %99 = arith.subf %93, %98 : vector<32x16xf32>
    %100 = arith.mulf %99, %99 : vector<32x16xf32>
    %cst_37 = arith.constant dense<0.000000e+00> : vector<16xf32>
    %101 = vector.multi_reduction <add>, %100, %cst_37 [0] : vector<32x16xf32> to vector<16xf32>
    %102 = vector.shape_cast %101 : vector<16xf32> to vector<1x16xf32>
    %cst_38 = arith.constant 3.200000e+01 : f32
    %103 = vector.broadcast %cst_38 : f32 to vector<1x16xf32>
    %104 = arith.divf %102, %103 : vector<1x16xf32>
    %cst_39 = arith.constant 9.99999974E-6 : f32
    %105 = vector.broadcast %cst_39 : f32 to vector<1x16xf32>
    %106 = arith.addf %104, %105 : vector<1x16xf32>
    %107 = math.rsqrt %106 : vector<1x16xf32>
    %108 = vector.broadcast %107 : vector<1x16xf32> to vector<32x16xf32>
    %109 = arith.mulf %99, %108 : vector<32x16xf32>
    %110 = vector.broadcast %75 : vector<32x1xf32> to vector<32x16xf32>
    %111 = arith.mulf %109, %110 : vector<32x16xf32>
    %112 = vector.broadcast %76 : vector<32x1xf32> to vector<32x16xf32>
    %113 = arith.addf %111, %112 : vector<32x16xf32>
    %c0_40 = arith.constant 0 : index
    %c0_41 = arith.constant 0 : index
    %c0_42 = arith.constant 0 : index
    %114 = vector.load %arg16[%c0_40, %c0_41, %c0_42] : memref<1x32x16xf32, #tpu.memory_space<vmem>>, vector<1x32x16xf32>
    %115 = vector.shape_cast %114 : vector<1x32x16xf32> to vector<32x16xf32>
    %116 = vector.shape_cast %113 : vector<32x16xf32> to vector<1x32x16xf32>
    tpu.vector_store %arg16[%c0_40, %c0_41, %c0_42], %116 {strides = array<i32>} : memref<1x32x16xf32, #tpu.memory_space<vmem>>, vector<1x32x16xf32>,
    %c0_43 = arith.constant 0 : index
    %c0_44 = arith.constant 0 : index
    %c0_45 = arith.constant 0 : index
    %117 = vector.load %arg1[%c0_43, %c0_44, %c0_45] : memref<1x16x32xf32, #tpu.memory_space<vmem>>, vector<1x16x32xf32>
    %118 = vector.shape_cast %117 : vector<1x16x32xf32> to vector<16x32xf32>
    %c0_46 = arith.constant 0 : index
    %c0_47 = arith.constant 0 : index
    %119 = vector.load %arg7[%c0_46, %c0_47] : memref<32x16xf32, #tpu.memory_space<vmem>>, vector<32x16xf32>
    %c0_48 = arith.constant 0 : index
    %c0_49 = arith.constant 0 : index
    %c0_50 = arith.constant 0 : index
    %120 = vector.load %arg4[%c0_48, %c0_49, %c0_50] : memref<1x1x32xf32, #tpu.memory_space<vmem>>, vector<1x1x32xf32>
    %121 = vector.shape_cast %120 : vector<1x1x32xf32> to vector<1x32xf32>
    %cst_51 = arith.constant 1.000000e+00 : f32
    %122 = vector.broadcast %cst_51 : f32 to vector<1x32xf32>
    %123 = arith.subf %122, %121 : vector<1x32xf32>
    %cst_52 = arith.constant dense<0.000000e+00> : vector<32x32xf32>
    %124 = tpu.matmul %119, %118, %cst_52 {dimension_numbers = #tpu.dot_dimension_numbers<[1], [0], [0], [1], [0, 0, 1, 1], [], []>} : vector<32x16xf32>, vector<16x32xf32>, vector<32x32xf32> -> vector<32x32xf32>
    %125 = vector.broadcast %123 : vector<1x32xf32> to vector<32x32xf32>
    %126 = arith.mulf %124, %125 : vector<32x32xf32>
    %c0_53 = arith.constant 0 : index
    %c0_54 = arith.constant 0 : index
    %127 = vector.load %arg13[%c0_53, %c0_54] : memref<16x32xf32, #tpu.memory_space<vmem>>, vector<16x32xf32>
    %cst_55 = arith.constant dense<0.000000e+00> : vector<32x32xf32>
    %128 = tpu.matmul %69, %127, %cst_55 {dimension_numbers = #tpu.dot_dimension_numbers<[1], [0], [0], [1], [0, 0, 1, 1], [], []>} : vector<32x16xf32>, vector<16x32xf32>, vector<32x32xf32> -> vector<32x32xf32>
    %129 = arith.addf %126, %128 : vector<32x32xf32>
    %c0_56 = arith.constant 0 : index
    %c0_57 = arith.constant 0 : index
    %130 = vector.load %arg10[%c0_56, %c0_57] : memref<32x6xf32, #tpu.memory_space<vmem>>, vector<32x6xf32>
    %131 = vector.extract_strided_slice %130 {offsets = [0, 0], sizes = [32, 1], strides = [1, 1]} : vector<32x6xf32> to vector<32x1xf32>
    %132 = vector.extract_strided_slice %130 {offsets = [0, 1], sizes = [32, 1], strides = [1, 1]} : vector<32x6xf32> to vector<32x1xf32>
    %133 = vector.extract_strided_slice %130 {offsets = [0, 2], sizes = [32, 1], strides = [1, 1]} : vector<32x6xf32> to vector<32x1xf32>
    %134 = vector.extract_strided_slice %130 {offsets = [0, 3], sizes = [32, 1], strides = [1, 1]} : vector<32x6xf32> to vector<32x1xf32>
    %135 = vector.extract_strided_slice %130 {offsets = [0, 4], sizes = [32, 1], strides = [1, 1]} : vector<32x6xf32> to vector<32x1xf32>
    %136 = vector.extract_strided_slice %130 {offsets = [0, 5], sizes = [32, 1], strides = [1, 1]} : vector<32x6xf32> to vector<32x1xf32>
    %cst_58 = arith.constant 0.000000e+00 : f32
    %137 = vector.broadcast %cst_58 : f32 to vector<32x1xf32>
    %138 = vector.extract_strided_slice %129 {offsets = [0, 0], sizes = [32, 31], strides = [1, 1]} : vector<32x32xf32> to vector<32x31xf32>
    %139 = tpu.concatenate %137, %138 in 1 : vector<32x1xf32>, vector<32x31xf32> -> vector<32x32xf32>
    %140 = vector.extract_strided_slice %129 {offsets = [0, 1], sizes = [32, 31], strides = [1, 1]} : vector<32x32xf32> to vector<32x31xf32>
    %141 = tpu.concatenate %140, %137 in 1 : vector<32x31xf32>, vector<32x1xf32> -> vector<32x32xf32>
    %142 = vector.broadcast %131 : vector<32x1xf32> to vector<32x32xf32>
    %143 = arith.mulf %142, %139 : vector<32x32xf32>
    %144 = vector.broadcast %132 : vector<32x1xf32> to vector<32x32xf32>
    %145 = arith.mulf %144, %129 : vector<32x32xf32>
    %146 = arith.addf %143, %145 : vector<32x32xf32>
    %147 = vector.broadcast %133 : vector<32x1xf32> to vector<32x32xf32>
    %148 = arith.mulf %147, %141 : vector<32x32xf32>
    %149 = arith.addf %146, %148 : vector<32x32xf32>
    %150 = vector.broadcast %134 : vector<32x1xf32> to vector<32x32xf32>
    %151 = arith.addf %149, %150 : vector<32x32xf32>
    %152 = vector.broadcast %123 : vector<1x32xf32> to vector<32x32xf32>
    %153 = arith.mulf %151, %152 : vector<32x32xf32>
    %cst_59 = arith.constant dense<0.000000e+00> : vector<32xf32>
    %154 = vector.multi_reduction <add>, %153, %cst_59 [0] : vector<32x32xf32> to vector<32xf32>
    %155 = vector.shape_cast %154 : vector<32xf32> to vector<1x32xf32>
    %cst_60 = arith.constant 3.200000e+01 : f32
    %156 = vector.broadcast %cst_60 : f32 to vector<1x32xf32>
    %157 = arith.divf %155, %156 : vector<1x32xf32>
    %158 = vector.broadcast %157 : vector<1x32xf32> to vector<32x32xf32>
    %159 = arith.subf %153, %158 : vector<32x32xf32>
    %160 = arith.mulf %159, %159 : vector<32x32xf32>
    %cst_61 = arith.constant dense<0.000000e+00> : vector<32xf32>
    %161 = vector.multi_reduction <add>, %160, %cst_61 [0] : vector<32x32xf32> to vector<32xf32>
    %162 = vector.shape_cast %161 : vector<32xf32> to vector<1x32xf32>
    %cst_62 = arith.constant 3.200000e+01 : f32
    %163 = vector.broadcast %cst_62 : f32 to vector<1x32xf32>
    %164 = arith.divf %162, %163 : vector<1x32xf32>
    %cst_63 = arith.constant 9.99999974E-6 : f32
    %165 = vector.broadcast %cst_63 : f32 to vector<1x32xf32>
    %166 = arith.addf %164, %165 : vector<1x32xf32>
    %167 = math.rsqrt %166 : vector<1x32xf32>
    %168 = vector.broadcast %167 : vector<1x32xf32> to vector<32x32xf32>
    %169 = arith.mulf %159, %168 : vector<32x32xf32>
    %170 = vector.broadcast %135 : vector<32x1xf32> to vector<32x32xf32>
    %171 = arith.mulf %169, %170 : vector<32x32xf32>
    %172 = vector.broadcast %136 : vector<32x1xf32> to vector<32x32xf32>
    %173 = arith.addf %171, %172 : vector<32x32xf32>
    %c0_64 = arith.constant 0 : index
    %c0_65 = arith.constant 0 : index
    %c0_66 = arith.constant 0 : index
    %174 = vector.load %arg15[%c0_64, %c0_65, %c0_66] : memref<1x32x32xf32, #tpu.memory_space<vmem>>, vector<1x32x32xf32>
    %175 = vector.shape_cast %174 : vector<1x32x32xf32> to vector<32x32xf32>
    %176 = vector.shape_cast %173 : vector<32x32xf32> to vector<1x32x32xf32>
    tpu.vector_store %arg15[%c0_64, %c0_65, %c0_66], %176 {strides = array<i32>} : memref<1x32x32xf32, #tpu.memory_space<vmem>>, vector<1x32x32xf32>,
    return
  }
  func.func @transform_0(%arg0: i32) -> (i32, i32, i32) {
    %c0_i32 = arith.constant 0 : i32
    %c0_i32_0 = arith.constant 0 : i32
    %c0_i32_1 = arith.constant 0 : i32
    return %arg0, %c0_i32, %c0_i32_0 : i32, i32, i32
  }
  func.func @transform_1(%arg0: i32) -> (i32, i32, i32) {
    %c0_i32 = arith.constant 0 : i32
    %c0_i32_0 = arith.constant 0 : i32
    %c0_i32_1 = arith.constant 0 : i32
    return %arg0, %c0_i32, %c0_i32_0 : i32, i32, i32
  }
  func.func @transform_2(%arg0: i32) -> (i32, i32, i32) {
    %c0_i32 = arith.constant 0 : i32
    %c0_i32_0 = arith.constant 0 : i32
    %c0_i32_1 = arith.constant 0 : i32
    return %arg0, %c0_i32, %c0_i32_0 : i32, i32, i32
  }
  func.func @transform_3(%arg0: i32) -> (i32, i32, i32) {
    %c0_i32 = arith.constant 0 : i32
    %c0_i32_0 = arith.constant 0 : i32
    %c0_i32_1 = arith.constant 0 : i32
    return %arg0, %c0_i32, %c0_i32_0 : i32, i32, i32
  }
  func.func @transform_4(%arg0: i32) -> (i32, i32, i32) {
    %c0_i32 = arith.constant 0 : i32
    %c0_i32_0 = arith.constant 0 : i32
    %c0_i32_1 = arith.constant 0 : i32
    return %arg0, %c0_i32, %c0_i32_0 : i32, i32, i32
  }
  func.func @transform_5(%arg0: i32) -> (i32, i32, i32) {
    %c0_i32 = arith.constant 0 : i32
    %c0_i32_0 = arith.constant 0 : i32
    %c0_i32_1 = arith.constant 0 : i32
    return %arg0, %c0_i32, %c0_i32_0 : i32, i32, i32
  }
  func.func @transform_6(%arg0: i32) -> (i32, i32) {
    %c0_i32 = arith.constant 0 : i32
    %c0_i32_0 = arith.constant 0 : i32
    %c0_i32_1 = arith.constant 0 : i32
    return %c0_i32, %c0_i32_0 : i32, i32
  }
  func.func @transform_7(%arg0: i32) -> (i32, i32) {
    %c0_i32 = arith.constant 0 : i32
    %c0_i32_0 = arith.constant 0 : i32
    %c0_i32_1 = arith.constant 0 : i32
    return %c0_i32, %c0_i32_0 : i32, i32
  }
  func.func @transform_8(%arg0: i32) -> (i32, i32) {
    %c0_i32 = arith.constant 0 : i32
    %c0_i32_0 = arith.constant 0 : i32
    %c0_i32_1 = arith.constant 0 : i32
    return %c0_i32, %c0_i32_0 : i32, i32
  }
  func.func @transform_9(%arg0: i32) -> (i32, i32) {
    %c0_i32 = arith.constant 0 : i32
    %c0_i32_0 = arith.constant 0 : i32
    %c0_i32_1 = arith.constant 0 : i32
    return %c0_i32, %c0_i32_0 : i32, i32
  }
  func.func @transform_10(%arg0: i32) -> (i32, i32) {
    %c0_i32 = arith.constant 0 : i32
    %c0_i32_0 = arith.constant 0 : i32
    %c0_i32_1 = arith.constant 0 : i32
    return %c0_i32, %c0_i32_0 : i32, i32
  }
  func.func @transform_11(%arg0: i32) -> (i32, i32) {
    %c0_i32 = arith.constant 0 : i32
    %c0_i32_0 = arith.constant 0 : i32
    %c0_i32_1 = arith.constant 0 : i32
    return %c0_i32, %c0_i32_0 : i32, i32
  }
  func.func @transform_12(%arg0: i32) -> (i32, i32) {
    %c0_i32 = arith.constant 0 : i32
    %c0_i32_0 = arith.constant 0 : i32
    %c0_i32_1 = arith.constant 0 : i32
    return %c0_i32, %c0_i32_0 : i32, i32
  }
  func.func @transform_13(%arg0: i32) -> (i32, i32) {
    %c0_i32 = arith.constant 0 : i32
    %c0_i32_0 = arith.constant 0 : i32
    %c0_i32_1 = arith.constant 0 : i32
    return %c0_i32, %c0_i32_0 : i32, i32
  }
  func.func @transform_14(%arg0: i32) -> (i32, i32, i32) {
    %c0_i32 = arith.constant 0 : i32
    %c0_i32_0 = arith.constant 0 : i32
    %c0_i32_1 = arith.constant 0 : i32
    return %arg0, %c0_i32, %c0_i32_0 : i32, i32, i32
  }
  func.func @transform_15(%arg0: i32) -> (i32, i32, i32) {
    %c0_i32 = arith.constant 0 : i32
    %c0_i32_0 = arith.constant 0 : i32
    %c0_i32_1 = arith.constant 0 : i32
    return %arg0, %c0_i32, %c0_i32_0 : i32, i32, i32
  }
  func.func @transform_16(%arg0: i32) -> (i32, i32, i32) {
    %c0_i32 = arith.constant 0 : i32
    %c0_i32_0 = arith.constant 0 : i32
    %c0_i32_1 = arith.constant 0 : i32
    return %arg0, %c0_i32, %c0_i32_0 : i32, i32, i32
  }
}

</mosaic_0001>

<llo_original>
// kernel: tpu_custom_call.1
$region0: #{tpu_custom_call.1}
  #allocation0 [shape = 'u32[]', space=smem, size = 0x4, offset = 0x4, fixed_abs, tag = 'smem constant byte address 0x4 - core index']
  #allocation1 [shape = 'u32[144,128]{1,0:T(1,128)}', space=vmem, size = 0x12000, scoped, tag = 'internal scratch']
  %s0 = inlined_call_operand.vmem [shape: f32[2,16,32], index: 0, kind: input, shape index: {}]
  %s1 = inlined_call_operand.vmem [shape: f32[2,32,16], index: 1, kind: input, shape index: {}]
  %s2 = inlined_call_operand.vmem [shape: f32[2,64,8], index: 2, kind: input, shape index: {}]
  %s3 = inlined_call_operand.vmem [shape: f32[2,1,32], index: 3, kind: input, shape index: {}]
  %s4 = inlined_call_operand.vmem [shape: f32[2,1,16], index: 4, kind: input, shape index: {}]
  %s5 = inlined_call_operand.vmem [shape: f32[2,1,8], index: 5, kind: input, shape index: {}]
  %s6 = inlined_call_operand.vmem [shape: f32[32,16], index: 6, kind: input, shape index: {}]
  %s7 = inlined_call_operand.vmem [shape: f32[32,32], index: 7, kind: input, shape index: {}]
  %s8 = inlined_call_operand.vmem [shape: f32[32,64], index: 8, kind: input, shape index: {}]
  %s9 = inlined_call_operand.vmem [shape: f32[32,6], index: 9, kind: input, shape index: {}]
  %s10 = inlined_call_operand.vmem [shape: f32[32,6], index: 10, kind: input, shape index: {}]
  %s11 = inlined_call_operand.vmem [shape: f32[32,6], index: 11, kind: input, shape index: {}]
  %s12 = inlined_call_operand.vmem [shape: f32[16,32], index: 12, kind: input, shape index: {}]
  %s13 = inlined_call_operand.vmem [shape: f32[8,16], index: 13, kind: input, shape index: {}]
  %s14 = inlined_call_operand.hbm [shape: f32[2,32,32], index: 14, kind: output, shape index: {0}]
  %s15 = inlined_call_operand.vmem [shape: f32[2,32,16], index: 15, kind: output, shape index: {1}]
  %s16 = inlined_call_operand.vmem [shape: f32[2,32,8], index: 16, kind: output, shape index: {2}]
  %17 = xla_tuple %s14, %s15, %s16
  %s18 = sld [smem:[#allocation0]]
  $region105: #{tpu_custom_call.1} parent=0
    _
  %s20 = ssub.s32 1, %s18
  %s21 = scalar_select 0, %s20, %s18
  $region1: #{tpu_custom_call.1} parent=0
    #allocation2 [shape = 'u8[32768]{0}', space=vmem, size = 0x8000, scoped, tag = 'output window, operand 0']
    #allocation3 [shape = 's32[2]{0}', space=sflag, size = 0x8, scoped, tag = 'scoped memory for tpu_custom_call.1']
    %22 = vsyncpa [#allocation3], 0
    %s23 = scalar_lea.sflag [#allocation3], 1
    %24 = vsyncpa %s23, 0
    loop: start=0, step=1, limit=4
    $region2: #{tpu_custom_call.1} parent=1 // loop_pre_header
      _
    $region3: #{tpu_custom_call.1} parent=1 // loop_header
      %s26 = sphi 0, %s30
      %p27 = scmp.ge.s32.totalorder %s26, 4
      %s36 = sphi 0, %s38
      %s39 = sphi 0, %s36
      %s40 = sphi 0, %s39
      %s56 = sphi 0, %s40
      %s62 = sphi 0, %s64
      %s65 = sphi 0, %s62
      %s66 = sphi 0, %s65
      %s82 = sphi 0, %s66
      %s88 = sphi 0, %s90
      %s91 = sphi 0, %s88
      %s92 = sphi 0, %s91
      %s108 = sphi 0, %s92
      %s114 = sphi 0, %s116
      %s117 = sphi 0, %s114
      %s118 = sphi 0, %s117
      %s134 = sphi 0, %s118
      %s140 = sphi 0, %s142
      %s143 = sphi 0, %s140
      %s144 = sphi 0, %s143
      %s160 = sphi 0, %s144
      %s166 = sphi 0, %s168
      %s169 = sphi 0, %s166
      %s170 = sphi 0, %s169
      %s186 = sphi 0, %s170
      %s190 = sphi 0, %s190
      %s192 = sphi 0, %s190
      %s193 = sphi 0, %s192
      %s207 = sphi 0, %s193
      %s211 = sphi 0, %s211
      %s213 = sphi 0, %s211
      %s214 = sphi 0, %s213
      %s228 = sphi 0, %s214
      %s232 = sphi 0, %s232
      %s234 = sphi 0, %s232
      %s235 = sphi 0, %s234
      %s249 = sphi 0, %s235
      %s253 = sphi 0, %s253
      %s255 = sphi 0, %s253
      %s256 = sphi 0, %s255
      %s270 = sphi 0, %s256
      %s274 = sphi 0, %s274
      %s276 = sphi 0, %s274
      %s277 = sphi 0, %s276
      %s291 = sphi 0, %s277
      %s295 = sphi 0, %s295
      %s297 = sphi 0, %s295
      %s298 = sphi 0, %s297
      %s312 = sphi 0, %s298
      %s316 = sphi 0, %s316
      %s318 = sphi 0, %s316
      %s319 = sphi 0, %s318
      %s333 = sphi 0, %s319
      %s337 = sphi 0, %s337
      %s339 = sphi 0, %s337
      %s340 = sphi 0, %s339
      %s354 = sphi 0, %s340
      %s360 = sphi 0, %s362
      %s363 = sphi 0, %s360
      %s364 = sphi 0, %s363
      %s380 = sphi 0, %s364
      %s386 = sphi 0, %s388
      %s389 = sphi 0, %s386
      %s390 = sphi 0, %s389
      %s406 = sphi 0, %s390
      %s412 = sphi 0, %s414
      %s415 = sphi 0, %s412
      %s416 = sphi 0, %s415
      %s432 = sphi 0, %s416
    $region4: #{tpu_custom_call.1} parent=1 // loop_header_branch
      %29 = sbr.rel (%p27) target = $region8
    $region5: #{tpu_custom_call.1} parent=1 // loop_body
      %s31 = ssub.s32 %s26, 1
      %s32 = ssub.s32 %s26, 2
      %s33 = sadd.s32 %s26, 1
      %s34 = ssub.s32 %s26, %s33
      %p35 = scmp.eq.s32.totalorder %s34, 0
      %s37 = sadd.s32 %s36, 1
      %s38 = scalar_select %p35, %s36, %s37
      %p41 = pneg %p35
      %p42 = scmp.eq.s32.totalorder %s26, 1
      %p43 = por %p41, %p42
      %p44 = scmp.ne.s32.totalorder %s36, %s39
      %p45 = scmp.eq.s32.totalorder %s26, 0
      %p46 = por %p44, %p45
      %p47 = scmp.ne.s32.totalorder %s36, %s39
      %p48 = scmp.eq.s32.totalorder %s31, 1
      %p49 = por %p47, %p48
      %p50 = scmp.ne.s32.totalorder %s39, %s40
      %p51 = scmp.eq.s32.totalorder %s31, 0
      %p52 = por %p50, %p51
      %p53 = scmp.ne.s32.totalorder %s39, %s40
      %p54 = scmp.eq.s32.totalorder %s32, 1
      %p55 = por %p53, %p54
      %p57 = scmp.ne.s32.totalorder %s40, %s56
      %p58 = scmp.eq.s32.totalorder %s32, 0
      %p59 = por %p57, %p58
      %s60 = ssub.s32 %s26, %s33
      %p61 = scmp.eq.s32.totalorder %s60, 0
      %s63 = sadd.s32 %s62, 1
      %s64 = scalar_select %p61, %s62, %s63
      %p67 = pneg %p61
      %p68 = scmp.eq.s32.totalorder %s26, 1
      %p69 = por %p67, %p68
      %p70 = scmp.ne.s32.totalorder %s62, %s65
      %p71 = scmp.eq.s32.totalorder %s26, 0
      %p72 = por %p70, %p71
      %p73 = scmp.ne.s32.totalorder %s62, %s65
      %p74 = scmp.eq.s32.totalorder %s31, 1
      %p75 = por %p73, %p74
      %p76 = scmp.ne.s32.totalorder %s65, %s66
      %p77 = scmp.eq.s32.totalorder %s31, 0
      %p78 = por %p76, %p77
      %p79 = scmp.ne.s32.totalorder %s65, %s66
      %p80 = scmp.eq.s32.totalorder %s32, 1
      %p81 = por %p79, %p80
      %p83 = scmp.ne.s32.totalorder %s66, %s82
      %p84 = scmp.eq.s32.totalorder %s32, 0
      %p85 = por %p83, %p84
      %s86 = ssub.s32 %s26, %s33
      %p87 = scmp.eq.s32.totalorder %s86, 0
      %s89 = sadd.s32 %s88, 1
      %s90 = scalar_select %p87, %s88, %s89
      %p93 = pneg %p87
      %p94 = scmp.eq.s32.totalorder %s26, 1
      %p95 = por %p93, %p94
      %p96 = scmp.ne.s32.totalorder %s88, %s91
      %p97 = scmp.eq.s32.totalorder %s26, 0
      %p98 = por %p96, %p97
      %p99 = scmp.ne.s32.totalorder %s88, %s91
      %p100 = scmp.eq.s32.totalorder %s31, 1
      %p101 = por %p99, %p100
      %p102 = scmp.ne.s32.totalorder %s91, %s92
      %p103 = scmp.eq.s32.totalorder %s31, 0
      %p104 = por %p102, %p103
      %p105 = scmp.ne.s32.totalorder %s91, %s92
      %p106 = scmp.eq.s32.totalorder %s32, 1
      %p107 = por %p105, %p106
      %p109 = scmp.ne.s32.totalorder %s92, %s108
      %p110 = scmp.eq.s32.totalorder %s32, 0
      %p111 = por %p109, %p110
      %s112 = ssub.s32 %s26, %s33
      %p113 = scmp.eq.s32.totalorder %s112, 0
      %s115 = sadd.s32 %s114, 1
      %s116 = scalar_select %p113, %s114, %s115
      %p119 = pneg %p113
      %p120 = scmp.eq.s32.totalorder %s26, 1
      %p121 = por %p119, %p120
      %p122 = scmp.ne.s32.totalorder %s114, %s117
      %p123 = scmp.eq.s32.totalorder %s26, 0
      %p124 = por %p122, %p123
      %p125 = scmp.ne.s32.totalorder %s114, %s117
      %p126 = scmp.eq.s32.totalorder %s31, 1
      %p127 = por %p125, %p126
      %p128 = scmp.ne.s32.totalorder %s117, %s118
      %p129 = scmp.eq.s32.totalorder %s31, 0
      %p130 = por %p128, %p129
      %p131 = scmp.ne.s32.totalorder %s117, %s118
      %p132 = scmp.eq.s32.totalorder %s32, 1
      %p133 = por %p131, %p132
      %p135 = scmp.ne.s32.totalorder %s118, %s134
      %p136 = scmp.eq.s32.totalorder %s32, 0
      %p137 = por %p135, %p136
      %s138 = ssub.s32 %s26, %s33
      %p139 = scmp.eq.s32.totalorder %s138, 0
      %s141 = sadd.s32 %s140, 1
      %s142 = scalar_select %p139, %s140, %s141
      %p145 = pneg %p139
      %p146 = scmp.eq.s32.totalorder %s26, 1
      %p147 = por %p145, %p146
      %p148 = scmp.ne.s32.totalorder %s140, %s143
      %p149 = scmp.eq.s32.totalorder %s26, 0
      %p150 = por %p148, %p149
      %p151 = scmp.ne.s32.totalorder %s140, %s143
      %p152 = scmp.eq.s32.totalorder %s31, 1
      %p153 = por %p151, %p152
      %p154 = scmp.ne.s32.totalorder %s143, %s144
      %p155 = scmp.eq.s32.totalorder %s31, 0
      %p156 = por %p154, %p155
      %p157 = scmp.ne.s32.totalorder %s143, %s144
      %p158 = scmp.eq.s32.totalorder %s32, 1
      %p159 = por %p157, %p158
      %p161 = scmp.ne.s32.totalorder %s144, %s160
      %p162 = scmp.eq.s32.totalorder %s32, 0
      %p163 = por %p161, %p162
      %s164 = ssub.s32 %s26, %s33
      %p165 = scmp.eq.s32.totalorder %s164, 0
      %s167 = sadd.s32 %s166, 1
      %s168 = scalar_select %p165, %s166, %s167
      %p171 = pneg %p165
      %p172 = scmp.eq.s32.totalorder %s26, 1
      %p173 = por %p171, %p172
      %p174 = scmp.ne.s32.totalorder %s166, %s169
      %p175 = scmp.eq.s32.totalorder %s26, 0
      %p176 = por %p174, %p175
      %p177 = scmp.ne.s32.totalorder %s166, %s169
      %p178 = scmp.eq.s32.totalorder %s31, 1
      %p179 = por %p177, %p178
      %p180 = scmp.ne.s32.totalorder %s169, %s170
      %p181 = scmp.eq.s32.totalorder %s31, 0
      %p182 = por %p180, %p181
      %p183 = scmp.ne.s32.totalorder %s169, %s170
      %p184 = scmp.eq.s32.totalorder %s32, 1
      %p185 = por %p183, %p184
      %p187 = scmp.ne.s32.totalorder %s170, %s186
      %p188 = scmp.eq.s32.totalorder %s32, 0
      %p189 = por %p187, %p188
      %s191 = sadd.s32 %s190, 1
      %p194 = scmp.eq.s32.totalorder %s26, 1
      %p195 = scmp.ne.s32.totalorder %s190, %s192
      %p196 = scmp.eq.s32.totalorder %s26, 0
      %p197 = por %p195, %p196
      %p198 = scmp.ne.s32.totalorder %s190, %s192
      %p199 = scmp.eq.s32.totalorder %s31, 1
      %p200 = por %p198, %p199
      %p201 = scmp.ne.s32.totalorder %s192, %s193
      %p202 = scmp.eq.s32.totalorder %s31, 0
      %p203 = por %p201, %p202
      %p204 = scmp.ne.s32.totalorder %s192, %s193
      %p205 = scmp.eq.s32.totalorder %s32, 1
      %p206 = por %p204, %p205
      %p208 = scmp.ne.s32.totalorder %s193, %s207
      %p209 = scmp.eq.s32.totalorder %s32, 0
      %p210 = por %p208, %p209
      %s212 = sadd.s32 %s211, 1
      %p215 = scmp.eq.s32.totalorder %s26, 1
      %p216 = scmp.ne.s32.totalorder %s211, %s213
      %p217 = scmp.eq.s32.totalorder %s26, 0
      %p218 = por %p216, %p217
      %p219 = scmp.ne.s32.totalorder %s211, %s213
      %p220 = scmp.eq.s32.totalorder %s31, 1
      %p221 = por %p219, %p220
      %p222 = scmp.ne.s32.totalorder %s213, %s214
      %p223 = scmp.eq.s32.totalorder %s31, 0
      %p224 = por %p222, %p223
      %p225 = scmp.ne.s32.totalorder %s213, %s214
      %p226 = scmp.eq.s32.totalorder %s32, 1
      %p227 = por %p225, %p226
      %p229 = scmp.ne.s32.totalorder %s214, %s228
      %p230 = scmp.eq.s32.totalorder %s32, 0
      %p231 = por %p229, %p230
      %s233 = sadd.s32 %s232, 1
      %p236 = scmp.eq.s32.totalorder %s26, 1
      %p237 = scmp.ne.s32.totalorder %s232, %s234
      %p238 = scmp.eq.s32.totalorder %s26, 0
      %p239 = por %p237, %p238
      %p240 = scmp.ne.s32.totalorder %s232, %s234
      %p241 = scmp.eq.s32.totalorder %s31, 1
      %p242 = por %p240, %p241
      %p243 = scmp.ne.s32.totalorder %s234, %s235
      %p244 = scmp.eq.s32.totalorder %s31, 0
      %p245 = por %p243, %p244
      %p246 = scmp.ne.s32.totalorder %s234, %s235
      %p247 = scmp.eq.s32.totalorder %s32, 1
      %p248 = por %p246, %p247
      %p250 = scmp.ne.s32.totalorder %s235, %s249
      %p251 = scmp.eq.s32.totalorder %s32, 0
      %p252 = por %p250, %p251
      %s254 = sadd.s32 %s253, 1
      %p257 = scmp.eq.s32.totalorder %s26, 1
      %p258 = scmp.ne.s32.totalorder %s253, %s255
      %p259 = scmp.eq.s32.totalorder %s26, 0
      %p260 = por %p258, %p259
      %p261 = scmp.ne.s32.totalorder %s253, %s255
      %p262 = scmp.eq.s32.totalorder %s31, 1
      %p263 = por %p261, %p262
      %p264 = scmp.ne.s32.totalorder %s255, %s256
      %p265 = scmp.eq.s32.totalorder %s31, 0
      %p266 = por %p264, %p265
      %p267 = scmp.ne.s32.totalorder %s255, %s256
      %p268 = scmp.eq.s32.totalorder %s32, 1
      %p269 = por %p267, %p268
      %p271 = scmp.ne.s32.totalorder %s256, %s270
      %p272 = scmp.eq.s32.totalorder %s32, 0
      %p273 = por %p271, %p272
      %s275 = sadd.s32 %s274, 1
      %p278 = scmp.eq.s32.totalorder %s26, 1
      %p279 = scmp.ne.s32.totalorder %s274, %s276
      %p280 = scmp.eq.s32.totalorder %s26, 0
      %p281 = por %p279, %p280
      %p282 = scmp.ne.s32.totalorder %s274, %s276
      %p283 = scmp.eq.s32.totalorder %s31, 1
      %p284 = por %p282, %p283
      %p285 = scmp.ne.s32.totalorder %s276, %s277
      %p286 = scmp.eq.s32.totalorder %s31, 0
      %p287 = por %p285, %p286
      %p288 = scmp.ne.s32.totalorder %s276, %s277
      %p289 = scmp.eq.s32.totalorder %s32, 1
      %p290 = por %p288, %p289
      %p292 = scmp.ne.s32.totalorder %s277, %s291
      %p293 = scmp.eq.s32.totalorder %s32, 0
      %p294 = por %p292, %p293
      %s296 = sadd.s32 %s295, 1
      %p299 = scmp.eq.s32.totalorder %s26, 1
      %p300 = scmp.ne.s32.totalorder %s295, %s297
      %p301 = scmp.eq.s32.totalorder %s26, 0
      %p302 = por %p300, %p301
      %p303 = scmp.ne.s32.totalorder %s295, %s297
      %p304 = scmp.eq.s32.totalorder %s31, 1
      %p305 = por %p303, %p304
      %p306 = scmp.ne.s32.totalorder %s297, %s298
      %p307 = scmp.eq.s32.totalorder %s31, 0
      %p308 = por %p306, %p307
      %p309 = scmp.ne.s32.totalorder %s297, %s298
      %p310 = scmp.eq.s32.totalorder %s32, 1
      %p311 = por %p309, %p310
      %p313 = scmp.ne.s32.totalorder %s298, %s312
      %p314 = scmp.eq.s32.totalorder %s32, 0
      %p315 = por %p313, %p314
      %s317 = sadd.s32 %s316, 1
      %p320 = scmp.eq.s32.totalorder %s26, 1
      %p321 = scmp.ne.s32.totalorder %s316, %s318
      %p322 = scmp.eq.s32.totalorder %s26, 0
      %p323 = por %p321, %p322
      %p324 = scmp.ne.s32.totalorder %s316, %s318
      %p325 = scmp.eq.s32.totalorder %s31, 1
      %p326 = por %p324, %p325
      %p327 = scmp.ne.s32.totalorder %s318, %s319
      %p328 = scmp.eq.s32.totalorder %s31, 0
      %p329 = por %p327, %p328
      %p330 = scmp.ne.s32.totalorder %s318, %s319
      %p331 = scmp.eq.s32.totalorder %s32, 1
      %p332 = por %p330, %p331
      %p334 = scmp.ne.s32.totalorder %s319, %s333
      %p335 = scmp.eq.s32.totalorder %s32, 0
      %p336 = por %p334, %p335
      %s338 = sadd.s32 %s337, 1
      %p341 = scmp.eq.s32.totalorder %s26, 1
      %p342 = scmp.ne.s32.totalorder %s337, %s339
      %p343 = scmp.eq.s32.totalorder %s26, 0
      %p344 = por %p342, %p343
      %p345 = scmp.ne.s32.totalorder %s337, %s339
      %p346 = scmp.eq.s32.totalorder %s31, 1
      %p347 = por %p345, %p346
      %p348 = scmp.ne.s32.totalorder %s339, %s340
      %p349 = scmp.eq.s32.totalorder %s31, 0
      %p350 = por %p348, %p349
      %p351 = scmp.ne.s32.totalorder %s339, %s340
      %p352 = scmp.eq.s32.totalorder %s32, 1
      %p353 = por %p351, %p352
      %p355 = scmp.ne.s32.totalorder %s340, %s354
      %p356 = scmp.eq.s32.totalorder %s32, 0
      %p357 = por %p355, %p356
      %s358 = ssub.s32 %s26, %s33
      %p359 = scmp.eq.s32.totalorder %s358, 0
      %s361 = sadd.s32 %s360, 1
      %s362 = scalar_select %p359, %s360, %s361
      %p365 = pneg %p359
      %p366 = scmp.eq.s32.totalorder %s26, 1
      %p367 = por %p365, %p366
      %p368 = scmp.ne.s32.totalorder %s360, %s363
      %p369 = scmp.eq.s32.totalorder %s26, 0
      %p370 = por %p368, %p369
      %p371 = scmp.ne.s32.totalorder %s360, %s363
      %p372 = scmp.eq.s32.totalorder %s31, 1
      %p373 = por %p371, %p372
      %p374 = scmp.ne.s32.totalorder %s363, %s364
      %p375 = scmp.eq.s32.totalorder %s31, 0
      %p376 = por %p374, %p375
      %p377 = scmp.ne.s32.totalorder %s363, %s364
      %p378 = scmp.eq.s32.totalorder %s32, 1
      %p379 = por %p377, %p378
      %p381 = scmp.ne.s32.totalorder %s364, %s380
      %p382 = scmp.eq.s32.totalorder %s32, 0
      %p383 = por %p381, %p382
      %s384 = ssub.s32 %s26, %s33
      %p385 = scmp.eq.s32.totalorder %s384, 0
      %s387 = sadd.s32 %s386, 1
      %s388 = scalar_select %p385, %s386, %s387
      %p391 = pneg %p385
      %p392 = scmp.eq.s32.totalorder %s26, 1
      %p393 = por %p391, %p392
      %p394 = scmp.ne.s32.totalorder %s386, %s389
      %p395 = scmp.eq.s32.totalorder %s26, 0
      %p396 = por %p394, %p395
      %p397 = scmp.ne.s32.totalorder %s386, %s389
      %p398 = scmp.eq.s32.totalorder %s31, 1
      %p399 = por %p397, %p398
      %p400 = scmp.ne.s32.totalorder %s389, %s390
      %p401 = scmp.eq.s32.totalorder %s31, 0
      %p402 = por %p400, %p401
      %p403 = scmp.ne.s32.totalorder %s389, %s390
      %p404 = scmp.eq.s32.totalorder %s32, 1
      %p405 = por %p403, %p404
      %p407 = scmp.ne.s32.totalorder %s390, %s406
      %p408 = scmp.eq.s32.totalorder %s32, 0
      %p409 = por %p407, %p408
      %s410 = ssub.s32 %s26, %s33
      %p411 = scmp.eq.s32.totalorder %s410, 0
      %s413 = sadd.s32 %s412, 1
      %s414 = scalar_select %p411, %s412, %s413
      %p417 = pneg %p411
      %p418 = scmp.eq.s32.totalorder %s26, 1
      %p419 = por %p417, %p418
      %p420 = scmp.ne.s32.totalorder %s412, %s415
      %p421 = scmp.eq.s32.totalorder %s26, 0
      %p422 = por %p420, %p421
      %p423 = scmp.ne.s32.totalorder %s412, %s415
      %p424 = scmp.eq.s32.totalorder %s31, 1
      %p425 = por %p423, %p424
      %p426 = scmp.ne.s32.totalorder %s415, %s416
      %p427 = scmp.eq.s32.totalorder %s31, 0
      %p428 = por %p426, %p427
      %p429 = scmp.ne.s32.totalorder %s415, %s416
      %p430 = scmp.eq.s32.totalorder %s32, 1
      %p431 = por %p429, %p430
      %p433 = scmp.ne.s32.totalorder %s416, %s432
      %p434 = scmp.eq.s32.totalorder %s32, 0
      %p435 = por %p433, %p434
      %p436 = scmp.le.s32.totalorder 1, %s26
      %p437 = scmp.lt.s32.totalorder %s26, 3
      %p438 = pnand %p436, %p437
      %p439 = pneg %p438
      // Predicated region
      $region9: #{tpu_custom_call.1} parent=5 // pred_check
        _
      $region10: #{tpu_custom_call.1} parent=5 // pred_check_branch
        %441 = sbr.rel (%p438) target = $region12
      $region11: #{tpu_custom_call.1} parent=5 // pred_region
        %s442 = ssub.s32 %s26, 1
        // Predicated region
        $region13: #{tpu_custom_call.1} parent=11 // pred_check
          %p443 = pneg %p203
        $region14: #{tpu_custom_call.1} parent=11 // pred_check_branch
          %445 = sbr.rel (%p443) target = $region16
        $region15: #{tpu_custom_call.1} parent=11 // pred_region
          _
        $region16: #{tpu_custom_call.1} parent=11 // pred_fallthru
          _
        // Predicated region
        $region17: #{tpu_custom_call.1} parent=11 // pred_check
          %p446 = pneg %p224
        $region18: #{tpu_custom_call.1} parent=11 // pred_check_branch
          %448 = sbr.rel (%p446) target = $region20
        $region19: #{tpu_custom_call.1} parent=11 // pred_region
          _
        $region20: #{tpu_custom_call.1} parent=11 // pred_fallthru
          _
        // Predicated region
        $region21: #{tpu_custom_call.1} parent=11 // pred_check
          %p449 = pneg %p245
        $region22: #{tpu_custom_call.1} parent=11 // pred_check_branch
          %451 = sbr.rel (%p449) target = $region24
        $region23: #{tpu_custom_call.1} parent=11 // pred_region
          _
        $region24: #{tpu_custom_call.1} parent=11 // pred_fallthru
          _
        // Predicated region
        $region25: #{tpu_custom_call.1} parent=11 // pred_check
          %p452 = pneg %p266
        $region26: #{tpu_custom_call.1} parent=11 // pred_check_branch
          %454 = sbr.rel (%p452) target = $region28
        $region27: #{tpu_custom_call.1} parent=11 // pred_region
          _
        $region28: #{tpu_custom_call.1} parent=11 // pred_fallthru
          _
        // Predicated region
        $region29: #{tpu_custom_call.1} parent=11 // pred_check
          %p455 = pneg %p287
        $region30: #{tpu_custom_call.1} parent=11 // pred_check_branch
          %457 = sbr.rel (%p455) target = $region32
        $region31: #{tpu_custom_call.1} parent=11 // pred_region
          _
        $region32: #{tpu_custom_call.1} parent=11 // pred_fallthru
          _
        // Predicated region
        $region33: #{tpu_custom_call.1} parent=11 // pred_check
          %p458 = pneg %p308
        $region34: #{tpu_custom_call.1} parent=11 // pred_check_branch
          %460 = sbr.rel (%p458) target = $region36
        $region35: #{tpu_custom_call.1} parent=11 // pred_region
          _
        $region36: #{tpu_custom_call.1} parent=11 // pred_fallthru
          _
        // Predicated region
        $region37: #{tpu_custom_call.1} parent=11 // pred_check
          %p461 = pneg %p329
        $region38: #{tpu_custom_call.1} parent=11 // pred_check_branch
          %463 = sbr.rel (%p461) target = $region40
        $region39: #{tpu_custom_call.1} parent=11 // pred_region
          _
        $region40: #{tpu_custom_call.1} parent=11 // pred_fallthru
          _
        // Predicated region
        $region41: #{tpu_custom_call.1} parent=11 // pred_check
          %p464 = pneg %p350
        $region42: #{tpu_custom_call.1} parent=11 // pred_check_branch
          %466 = sbr.rel (%p464) target = $region44
        $region43: #{tpu_custom_call.1} parent=11 // pred_region
          _
        $region44: #{tpu_custom_call.1} parent=11 // pred_fallthru
          _
      $region12: #{tpu_custom_call.1} parent=5 // pred_fallthru
        _
      %p467 = scmp.lt.s32.totalorder %s26, 2
      // Predicated region
      $region45: #{tpu_custom_call.1} parent=5 // pred_check
        %p468 = pneg %p467
      $region46: #{tpu_custom_call.1} parent=5 // pred_check_branch
        %470 = sbr.rel (%p468) target = $region48
      $region47: #{tpu_custom_call.1} parent=5 // pred_region
        // Predicated region
        $region49: #{tpu_custom_call.1} parent=47 // pred_check
          %p471 = pneg %p46
        $region50: #{tpu_custom_call.1} parent=47 // pred_check_branch
          %473 = sbr.rel (%p471) target = $region52
        $region51: #{tpu_custom_call.1} parent=47 // pred_region
          %p474 = scmp.lt.s32.totalorder %s26, 1
          %s475 = scalar_select %p474, %s26, 1
          %s476 = smul.addr %s475, 2
          %s477 = smul.addr %s476, 8
          %s478 = scalar_lea.vmem %s0, %s477
        $region52: #{tpu_custom_call.1} parent=47 // pred_fallthru
          _
        // Predicated region
        $region53: #{tpu_custom_call.1} parent=47 // pred_check
          %p479 = pneg %p72
        $region54: #{tpu_custom_call.1} parent=47 // pred_check_branch
          %481 = sbr.rel (%p479) target = $region56
        $region55: #{tpu_custom_call.1} parent=47 // pred_region
          %p482 = scmp.lt.s32.totalorder %s26, 1
          %s483 = scalar_select %p482, %s26, 1
          %s484 = smul.addr %s483, 4
          %s485 = smul.addr %s484, 8
          %s486 = scalar_lea.vmem %s1, %s485
        $region56: #{tpu_custom_call.1} parent=47 // pred_fallthru
          _
        // Predicated region
        $region57: #{tpu_custom_call.1} parent=47 // pred_check
          %p487 = pneg %p98
        $region58: #{tpu_custom_call.1} parent=47 // pred_check_branch
          %489 = sbr.rel (%p487) target = $region60
        $region59: #{tpu_custom_call.1} parent=47 // pred_region
          %p490 = scmp.lt.s32.totalorder %s26, 1
          %s491 = scalar_select %p490, %s26, 1
          %s492 = smul.addr %s491, 8
          %s493 = smul.addr %s492, 8
          %s494 = scalar_lea.vmem %s2, %s493
        $region60: #{tpu_custom_call.1} parent=47 // pred_fallthru
          _
        // Predicated region
        $region61: #{tpu_custom_call.1} parent=47 // pred_check
          %p495 = pneg %p124
        $region62: #{tpu_custom_call.1} parent=47 // pred_check_branch
          %497 = sbr.rel (%p495) target = $region64
        $region63: #{tpu_custom_call.1} parent=47 // pred_region
          %p498 = scmp.lt.s32.totalorder %s26, 1
          %s499 = scalar_select %p498, %s26, 1
          %s500 = scalar_lea.vmem %s3, %s499
        $region64: #{tpu_custom_call.1} parent=47 // pred_fallthru
          _
        // Predicated region
        $region65: #{tpu_custom_call.1} parent=47 // pred_check
          %p501 = pneg %p150
        $region66: #{tpu_custom_call.1} parent=47 // pred_check_branch
          %503 = sbr.rel (%p501) target = $region68
        $region67: #{tpu_custom_call.1} parent=47 // pred_region
          %p504 = scmp.lt.s32.totalorder %s26, 1
          %s505 = scalar_select %p504, %s26, 1
          %s506 = scalar_lea.vmem %s4, %s505
        $region68: #{tpu_custom_call.1} parent=47 // pred_fallthru
          _
        // Predicated region
        $region69: #{tpu_custom_call.1} parent=47 // pred_check
          %p507 = pneg %p176
        $region70: #{tpu_custom_call.1} parent=47 // pred_check_branch
          %509 = sbr.rel (%p507) target = $region72
        $region71: #{tpu_custom_call.1} parent=47 // pred_region
          %p510 = scmp.lt.s32.totalorder %s26, 1
          %s511 = scalar_select %p510, %s26, 1
          %s512 = scalar_lea.vmem %s5, %s511
        $region72: #{tpu_custom_call.1} parent=47 // pred_fallthru
          _
      $region48: #{tpu_custom_call.1} parent=5 // pred_fallthru
        _
      %p513 = scmp.le.s32.totalorder 1, %s26
      %p514 = scmp.lt.s32.totalorder %s26, 3
      %p515 = pnand %p513, %p514
      %p516 = pneg %p515
      // Predicated region
      $region73: #{tpu_custom_call.1} parent=5 // pred_check
        _
      $region74: #{tpu_custom_call.1} parent=5 // pred_check_branch
        %518 = sbr.rel (%p515) target = $region76
      $region75: #{tpu_custom_call.1} parent=5 // pred_region
        %s519 = ssub.s32 %s26, 1
        %p520 = scmp.lt.s32.totalorder %s31, 1
        %s521 = scalar_select %p520, %s31, 1
        %s522 = smul.addr %s521, 2
        %s523 = smul.addr %s522, 8
        %s524 = scalar_lea.vmem %s0, %s523
        %p525 = pneg %p52
        %p526 = pneg %p49
        %p527 = scmp.lt.s32.totalorder %s31, 1
        %s528 = scalar_select %p527, %s31, 1
        %s529 = smul.addr %s528, 4
        %s530 = smul.addr %s529, 8
        %s531 = scalar_lea.vmem %s1, %s530
        %p532 = pneg %p78
        %p533 = pneg %p75
        %p534 = scmp.lt.s32.totalorder %s31, 1
        %s535 = scalar_select %p534, %s31, 1
        %s536 = smul.addr %s535, 8
        %s537 = smul.addr %s536, 8
        %s538 = scalar_lea.vmem %s2, %s537
        %p539 = pneg %p104
        %p540 = pneg %p101
        %p541 = scmp.lt.s32.totalorder %s31, 1
        %s542 = scalar_select %p541, %s31, 1
        %s543 = scalar_lea.vmem %s3, %s542
        %p544 = pneg %p130
        %p545 = pneg %p127
        %p546 = scmp.lt.s32.totalorder %s31, 1
        %s547 = scalar_select %p546, %s31, 1
        %s548 = scalar_lea.vmem %s4, %s547
        %p549 = pneg %p156
        %p550 = pneg %p153
        %p551 = scmp.lt.s32.totalorder %s31, 1
        %s552 = scalar_select %p551, %s31, 1
        %s553 = scalar_lea.vmem %s5, %s552
        %p554 = pneg %p182
        %p555 = pneg %p179
        %p556 = pneg %p203
        %p557 = pneg %p200
        %p558 = pneg %p224
        %p559 = pneg %p221
        %p560 = pneg %p245
        %p561 = pneg %p242
        %p562 = pneg %p266
        %p563 = pneg %p263
        %p564 = pneg %p287
        %p565 = pneg %p284
        %p566 = pneg %p308
        %p567 = pneg %p305
        %p568 = pneg %p329
        %p569 = pneg %p326
        %p570 = pneg %p350
        %p571 = pneg %p347
        %p572 = pneg %p376
        %p573 = pneg %p373
        %s574 = sand.u32 %s363, 1
        %s575 = scalar_lea.sflag [#allocation3], %s574
        %s576 = sand.u32 %s363, 1
        %s577 = smul.addr %s576, 32
        %s578 = scalar_lea.vmem [#allocation2], %s577
        %p579 = pneg %p402
        %p580 = pneg %p399
        %p581 = scmp.lt.s32.totalorder %s31, 1
        %s582 = scalar_select %p581, %s31, 1
        %s583 = smul.addr %s582, 4
        %s584 = smul.addr %s583, 8
        %s585 = scalar_lea.vmem %s15, %s584
        %p586 = pneg %p428
        %p587 = pneg %p425
        %p588 = scmp.lt.s32.totalorder %s31, 1
        %s589 = scalar_select %p588, %s31, 1
        %s590 = smul.addr %s589, 4
        %s591 = smul.addr %s590, 8
        %s592 = scalar_lea.vmem %s16, %s591
        %p593 = scmp.lt.s32.totalorder %s31, 1
        %s594 = scalar_select %p593, %s31, 1
        %s595 = smul.addr %s594, 2
        %s596 = smul.addr %s595, 8
        %s597 = scalar_lea.vmem %s0, %s596
        %p598 = scmp.lt.s32.totalorder %s31, 1
        %s599 = scalar_select %p598, %s31, 1
        %s600 = smul.addr %s599, 4
        %s601 = smul.addr %s600, 8
        %s602 = scalar_lea.vmem %s1, %s601
        %p603 = scmp.lt.s32.totalorder %s31, 1
        %s604 = scalar_select %p603, %s31, 1
        %s605 = smul.addr %s604, 8
        %s606 = smul.addr %s605, 8
        %s607 = scalar_lea.vmem %s2, %s606
        %p608 = scmp.lt.s32.totalorder %s31, 1
        %s609 = scalar_select %p608, %s31, 1
        %s610 = scalar_lea.vmem %s3, %s609
        %p611 = scmp.lt.s32.totalorder %s31, 1
        %s612 = scalar_select %p611, %s31, 1
        %s613 = scalar_lea.vmem %s4, %s612
        %p614 = scmp.lt.s32.totalorder %s31, 1
        %s615 = scalar_select %p614, %s31, 1
        %s616 = scalar_lea.vmem %s5, %s615
        %p617 = scmp.lt.s32.totalorder %s31, 1
        %s618 = scalar_select %p617, %s31, 1
        %s619 = smul.addr %s618, 4
        %s620 = smul.addr %s619, 8
        %s621 = scalar_lea.vmem %s15, %s620
        %p622 = scmp.lt.s32.totalorder %s31, 1
        %s623 = scalar_select %p622, %s31, 1
        %s624 = smul.addr %s623, 4
        %s625 = smul.addr %s624, 8
        %s626 = scalar_lea.vmem %s16, %s625
        %v627 = vld [vmem:[%s607] sm:$0xff]
        %v628 = vld [vmem:[%s607 + $0x8] sm:$0xff]
        %v629 = vld [vmem:[%s607 + $0x10] sm:$0xff]
        %v630 = vld [vmem:[%s607 + $0x18] sm:$0xff]
        %v631 = vld [vmem:[%s607 + $0x20] sm:$0xff]
        %v632 = vld [vmem:[%s607 + $0x28] sm:$0xff]
        %v633 = vld [vmem:[%s607 + $0x30] sm:$0xff]
        %v634 = vld [vmem:[%s607 + $0x38] sm:$0xff]
        %v635 = vld [vmem:[%s8] sm:$0xff]
        %v636 = vld [vmem:[%s8 + $0x8] sm:$0xff]
        %v637 = vld [vmem:[%s8 + $0x10] sm:$0xff]
        %v638 = vld [vmem:[%s8 + $0x18] sm:$0xff]
        %v639 = vld [vmem:[%s616] sm:$0x1]
        %v640 = vsub.f32 1.0, %v639
        %vm641 = vcmask 523264
        %v643 = vsel %vm641, %v635, 0
        %v646 = vsel %vm641, %v636, 0
        %v649 = vsel %vm641, %v637, 0
        %v652 = vsel %vm641, %v638, 0
        %654 = vmatprep.subr.mxu0 0.0
        %655 = vmatpush1.msra.mxu0 %v627
        %656 = vmatprep.subr.mxu0 0.0
        %657 = vmatpush1.msra.mxu0 %v628
        %658 = vmatprep.subr.mxu0 0.0
        %659 = vmatpush1.msra.mxu0 %v629
        %660 = vmatprep.subr.mxu0 0.0
        %661 = vmatpush1.msra.mxu0 %v630
        %662 = vmatprep.subr.mxu0 0.0
        %663 = vmatpush1.msra.mxu0 %v631
        %664 = vmatprep.subr.mxu0 0.0
        %665 = vmatpush1.msra.mxu0 %v632
        %666 = vmatprep.subr.mxu0 0.0
        %667 = vmatpush1.msra.mxu0 %v633
        %668 = vmatprep.subr.mxu0 0.0
        %669 = vmatpush1.msra.mxu0 %v634
        %670 = vmatprep.subr.mxu0 0.0
        %671 = vmatpush1.msra.mxu0 0.0
        %672 = vmatprep.subr.mxu0 0.0
        %673 = vmatpush1.msra.mxu0 0.0
        %674 = vmatprep.subr.mxu0 0.0
        %675 = vmatpush1.msra.mxu0 0.0
        %676 = vmatprep.subr.mxu0 0.0
        %677 = vmatpush1.msra.mxu0 0.0
        %678 = vmatprep.subr.mxu0 0.0
        %679 = vmatpush1.msra.mxu0 0.0
        %680 = vmatprep.subr.mxu0 0.0
        %681 = vmatpush1.msra.mxu0 0.0
        %682 = vmatprep.subr.mxu0 0.0
        %683 = vmatpush1.msra.mxu0 0.0
        %684 = vmatprep.subr.mxu0 0.0
        %685 = vmatpush1.msra.mxu0 0.0
        %686 = vmatprep.subr.mxu0 0.0
        %687 = vmatpush1.msra.mxu0 0.0
        %688 = vmatprep.subr.mxu0 0.0
        %689 = vmatpush1.msra.mxu0 0.0
        %690 = vmatprep.subr.mxu0 0.0
        %691 = vmatpush1.msra.mxu0 0.0
        %692 = vmatprep.subr.mxu0 0.0
        %693 = vmatpush1.msra.mxu0 0.0
        %694 = vmatprep.subr.mxu0 0.0
        %695 = vmatpush1.msra.mxu0 0.0
        %696 = vmatprep.subr.mxu0 0.0
        %697 = vmatpush1.msra.mxu0 0.0
        %698 = vmatprep.subr.mxu0 0.0
        %699 = vmatpush1.msra.mxu0 0.0
        %700 = vmatprep.subr.mxu0 0.0
        %701 = vmatpush1.msra.mxu0 0.0
        %702 = vmatprep.subr.mxu0 0.0
        %703 = vmatpush1.msra.mxu0 0.0
        %704 = vmatprep.subr.mxu0 0.0
        %705 = vmatpush1.msra.mxu0 0.0
        %706 = vmatprep.subr.mxu0 0.0
        %707 = vmatpush1.msra.mxu0 0.0
        %708 = vmatprep.subr.mxu0 0.0
        %709 = vmatpush1.msra.mxu0 0.0
        %710 = vmatprep.subr.mxu0 0.0
        %711 = vmatpush1.msra.mxu0 0.0
        %712 = vmatprep.subr.mxu0 0.0
        %713 = vmatpush1.msra.mxu0 0.0
        %714 = vmatprep.subr.mxu0 0.0
        %715 = vmatpush1.msra.mxu0 0.0
        %716 = vmatprep.subr.mxu0 0.0
        %717 = vmatpush1.msra.mxu0 0.0
        %718 = vmatprep.mubr.f32.mxu0 0.0
        %719 = vmatmul.mubr.f32.gmra.mrb[0].mxu0 %v643
        %v720 = vpop.f32.mrb[0].mxu0
        %v721 = vadd.f32 0.0, %v720
        %v722 = vpop.f32.mrb[0].mxu0
        %723 = vmatprep.mubr.f32.mxu0 0.0
        %724 = vmatmul.mubr.f32.gmra.mrb[0].mxu0 %v646
        %v725 = vpop.f32.mrb[0].mxu0
        %v726 = vadd.f32 0.0, %v725
        %v727 = vpop.f32.mrb[0].mxu0
        %728 = vmatprep.mubr.f32.mxu0 0.0
        %729 = vmatmul.mubr.f32.gmra.mrb[0].mxu0 %v649
        %v730 = vpop.f32.mrb[0].mxu0
        %v731 = vadd.f32 0.0, %v730
        %v732 = vpop.f32.mrb[0].mxu0
        %733 = vmatprep.mubr.f32.mxu0 0.0
        %734 = vmatmul.mubr.f32.gmra.mrb[0].mxu0 %v652
        %v735 = vpop.f32.mrb[0].mxu0
        %v736 = vadd.f32 0.0, %v735
        %v737 = vpop.f32.mrb[0].mxu0
        %738 = vdwg.mxu0
        %v740 = vlaneseq
        %v741 = vshrl.u32 %v740, 7
        %v742 = vsub.s32 0, %v741
        %v743 = vrot.slane %v640, %v742
        %v745 = vmul.f32 %v721, %v743
        %v746 = vmul.f32 %v726, %v743
        %v747 = vmul.f32 %v731, %v743
        %v748 = vmul.f32 %v736, %v743
        %v749 = vld [vmem:[%s11] sm:$0xff]
        %v750 = vld [vmem:[%s11 + $0x8] sm:$0xff]
        %v751 = vld [vmem:[%s11 + $0x10] sm:$0xff]
        %v752 = vld [vmem:[%s11 + $0x18] sm:$0xff]
        %757 = vrot.lane.b32.xlu0 %v745, 1
        %v758 = vpop.permute.xlu0 %757
        %759 = vrot.lane.b32.xlu0 %v746, 1
        %v760 = vpop.permute.xlu0 %759
        %761 = vrot.lane.b32.xlu0 %v747, 1
        %v762 = vpop.permute.xlu0 %761
        %763 = vrot.lane.b32.xlu0 %v748, 1
        %v764 = vpop.permute.xlu0 %763
        %vm769 = vcmask 7168
        %v770 = vsel %vm769, 0.0, %v758
        %v771 = vsel %vm769, 0.0, %v760
        %v772 = vsel %vm769, 0.0, %v762
        %v773 = vsel %vm769, 0.0, %v764
        %774 = vrot.lane.b32.xlu0 %v745, 127
        %v775 = vpop.permute.xlu0 %774
        %776 = vrot.lane.b32.xlu0 %v746, 127
        %v777 = vpop.permute.xlu0 %776
        %778 = vrot.lane.b32.xlu0 %v747, 127
        %v779 = vpop.permute.xlu0 %778
        %780 = vrot.lane.b32.xlu0 %v748, 127
        %v781 = vpop.permute.xlu0 %780
        %vm786 = vcmask 56320
        %v787 = vsel %vm786, %v775, 0.0
        %v788 = vsel %vm786, %v777, 0.0
        %v789 = vsel %vm786, %v779, 0.0
        %v790 = vsel %vm786, %v781, 0.0
        %792 = vset.pattern.permute.xlu0 0
        %793 = vperm.xlu0 %792, %v749
        %v794 = vpop.permute.xlu0 %793
        %797 = vset.pattern.permute.xlu0 0
        %798 = vperm.xlu0 %797, %v750
        %v799 = vpop.permute.xlu0 %798
        %802 = vset.pattern.permute.xlu0 0
        %803 = vperm.xlu0 %802, %v751
        %v804 = vpop.permute.xlu0 %803
        %807 = vset.pattern.permute.xlu0 0
        %808 = vperm.xlu0 %807, %v752
        %v809 = vpop.permute.xlu0 %808
        %v811 = vmul.f32 %v794, %v770
        %v812 = vmul.f32 %v799, %v771
        %v813 = vmul.f32 %v804, %v772
        %v814 = vmul.f32 %v809, %v773
        %815 = vset.pattern.permute.xlu0 1
        %816 = vperm.xlu0 %815, %v749
        %v817 = vpop.permute.xlu0 %816
        %819 = vset.pattern.permute.xlu0 1
        %820 = vperm.xlu0 %819, %v750
        %v821 = vpop.permute.xlu0 %820
        %823 = vset.pattern.permute.xlu0 1
        %824 = vperm.xlu0 %823, %v751
        %v825 = vpop.permute.xlu0 %824
        %827 = vset.pattern.permute.xlu0 1
        %828 = vperm.xlu0 %827, %v752
        %v829 = vpop.permute.xlu0 %828
        %v831 = vmul.f32 %v817, %v745
        %v832 = vmul.f32 %v821, %v746
        %v833 = vmul.f32 %v825, %v747
        %v834 = vmul.f32 %v829, %v748
        %v835 = vadd.f32 %v811, %v831
        %v836 = vadd.f32 %v812, %v832
        %v837 = vadd.f32 %v813, %v833
        %v838 = vadd.f32 %v814, %v834
        %839 = vset.pattern.permute.xlu0 2
        %840 = vperm.xlu0 %839, %v749
        %v841 = vpop.permute.xlu0 %840
        %843 = vset.pattern.permute.xlu0 2
        %844 = vperm.xlu0 %843, %v750
        %v845 = vpop.permute.xlu0 %844
        %847 = vset.pattern.permute.xlu0 2
        %848 = vperm.xlu0 %847, %v751
        %v849 = vpop.permute.xlu0 %848
        %851 = vset.pattern.permute.xlu0 2
        %852 = vperm.xlu0 %851, %v752
        %v853 = vpop.permute.xlu0 %852
        %v855 = vmul.f32 %v841, %v787
        %v856 = vmul.f32 %v845, %v788
        %v857 = vmul.f32 %v849, %v789
        %v858 = vmul.f32 %v853, %v790
        %v859 = vadd.f32 %v835, %v855
        %v860 = vadd.f32 %v836, %v856
        %v861 = vadd.f32 %v837, %v857
        %v862 = vadd.f32 %v838, %v858
        %863 = vset.pattern.permute.xlu0 3
        %864 = vperm.xlu0 %863, %v749
        %v865 = vpop.permute.xlu0 %864
        %867 = vset.pattern.permute.xlu0 3
        %868 = vperm.xlu0 %867, %v750
        %v869 = vpop.permute.xlu0 %868
        %871 = vset.pattern.permute.xlu0 3
        %872 = vperm.xlu0 %871, %v751
        %v873 = vpop.permute.xlu0 %872
        %875 = vset.pattern.permute.xlu0 3
        %876 = vperm.xlu0 %875, %v752
        %v877 = vpop.permute.xlu0 %876
        %v879 = vadd.f32 %v859, %v865
        %v880 = vadd.f32 %v860, %v869
        %v881 = vadd.f32 %v861, %v873
        %v882 = vadd.f32 %v862, %v877
        %v883 = vmul.f32 %v879, %v743
        %v884 = vmul.f32 %v880, %v743
        %v885 = vmul.f32 %v881, %v743
        %v886 = vmul.f32 %v882, %v743
        %vm887 = vcmask 64512
        %v888 = vsel %vm887, %v883, 0.0
        %v889 = vsel %vm887, %v884, 0.0
        %v890 = vadd.f32 %v888, %v889
        %v891 = vsel %vm887, %v885, 0.0
        %v892 = vadd.f32 %v890, %v891
        %v893 = vsel %vm887, %v886, 0.0
        %v894 = vadd.f32 %v892, %v893
        %v895 = vrot.slane %v894, 4
        %v896 = vadd.f32 %v894, %v895
        %v897 = vrot.slane %v896, 2
        %v898 = vadd.f32 %v896, %v897
        %v899 = vrot.slane %v898, 1
        %v900 = vadd.f32 %v898, %v899
        %v901 = vrcp.pop 32.0
        %v902 = vmul.f32 %v900, %v901
        %v903 = vsub.f32 %v883, %v902
        %v904 = vsub.f32 %v884, %v902
        %v905 = vsub.f32 %v885, %v902
        %v906 = vsub.f32 %v886, %v902
        %v907 = vmul.f32 %v903, %v903
        %v908 = vmul.f32 %v904, %v904
        %v909 = vmul.f32 %v905, %v905
        %v910 = vmul.f32 %v906, %v906
        %v911 = vsel %vm887, %v907, 0.0
        %v912 = vsel %vm887, %v908, 0.0
        %v913 = vadd.f32 %v911, %v912
        %v914 = vsel %vm887, %v909, 0.0
        %v915 = vadd.f32 %v913, %v914
        %v916 = vsel %vm887, %v910, 0.0
        %v917 = vadd.f32 %v915, %v916
        %v918 = vrot.slane %v917, 4
        %v919 = vadd.f32 %v917, %v918
        %v920 = vrot.slane %v919, 2
        %v921 = vadd.f32 %v919, %v920
        %v922 = vrot.slane %v921, 1
        %v923 = vadd.f32 %v921, %v922
        %v924 = vmul.f32 %v923, %v901
        %v925 = vadd.f32 %v924, 1e-05
        %v926 = vrsqrt.pop %v925
        %v927 = vmul.f32 %v903, %v926
        %v928 = vmul.f32 %v904, %v926
        %v929 = vmul.f32 %v905, %v926
        %v930 = vmul.f32 %v906, %v926
        %931 = vset.pattern.permute.xlu0 4
        %932 = vperm.xlu0 %931, %v749
        %v933 = vpop.permute.xlu0 %932
        %935 = vset.pattern.permute.xlu0 4
        %936 = vperm.xlu0 %935, %v750
        %v937 = vpop.permute.xlu0 %936
        %939 = vset.pattern.permute.xlu0 4
        %940 = vperm.xlu0 %939, %v751
        %v941 = vpop.permute.xlu0 %940
        %943 = vset.pattern.permute.xlu0 4
        %944 = vperm.xlu0 %943, %v752
        %v945 = vpop.permute.xlu0 %944
        %v947 = vmul.f32 %v927, %v933
        %v948 = vmul.f32 %v928, %v937
        %v949 = vmul.f32 %v929, %v941
        %v950 = vmul.f32 %v930, %v945
        %951 = vset.pattern.permute.xlu0 5
        %952 = vperm.xlu0 %951, %v749
        %v953 = vpop.permute.xlu0 %952
        %955 = vset.pattern.permute.xlu0 5
        %956 = vperm.xlu0 %955, %v750
        %v957 = vpop.permute.xlu0 %956
        %959 = vset.pattern.permute.xlu0 5
        %960 = vperm.xlu0 %959, %v751
        %v961 = vpop.permute.xlu0 %960
        %963 = vset.pattern.permute.xlu0 5
        %964 = vperm.xlu0 %963, %v752
        %v965 = vpop.permute.xlu0 %964
        %v967 = vadd.f32 %v947, %v953
        %v968 = vadd.f32 %v948, %v957
        %v969 = vadd.f32 %v949, %v961
        %v970 = vadd.f32 %v950, %v965
        %971 = vst.msk [vmem:[%s626] sm:$0xff] %vm887, %v967
        %972 = vst.msk [vmem:[%s626 + $0x8] sm:$0xff] %vm887, %v968
        %973 = vst.msk [vmem:[%s626 + $0x10] sm:$0xff] %vm887, %v969
        %974 = vst.msk [vmem:[%s626 + $0x18] sm:$0xff] %vm887, %v970
        %v975 = vld [vmem:[%s602] sm:$0xff]
        %v976 = vld [vmem:[%s602 + $0x8] sm:$0xff]
        %v977 = vld [vmem:[%s602 + $0x10] sm:$0xff]
        %v978 = vld [vmem:[%s602 + $0x18] sm:$0xff]
        %v979 = vld [vmem:[%s7] sm:$0xff]
        %v980 = vld [vmem:[%s7 + $0x8] sm:$0xff]
        %v981 = vld [vmem:[%s7 + $0x10] sm:$0xff]
        %v982 = vld [vmem:[%s7 + $0x18] sm:$0xff]
        %v983 = vld [vmem:[%s613] sm:$0x1]
        %v984 = vsub.f32 1.0, %v983
        %vm985 = vcmask 261120
        %v987 = vsel %vm985, %v979, 0
        %v990 = vsel %vm985, %v980, 0
        %v993 = vsel %vm985, %v981, 0
        %v996 = vsel %vm985, %v982, 0
        %998 = vmatprep.subr.mxu0 0.0
        %999 = vmatpush1.msra.mxu0 %v975
        %1000 = vmatprep.subr.mxu0 0.0
        %1001 = vmatpush1.msra.mxu0 %v976
        %1002 = vmatprep.subr.mxu0 0.0
        %1003 = vmatpush1.msra.mxu0 %v977
        %1004 = vmatprep.subr.mxu0 0.0
        %1005 = vmatpush1.msra.mxu0 %v978
        %1006 = vmatprep.subr.mxu0 0.0
        %1007 = vmatpush1.msra.mxu0 0.0
        %1008 = vmatprep.subr.mxu0 0.0
        %1009 = vmatpush1.msra.mxu0 0.0
        %1010 = vmatprep.subr.mxu0 0.0
        %1011 = vmatpush1.msra.mxu0 0.0
        %1012 = vmatprep.subr.mxu0 0.0
        %1013 = vmatpush1.msra.mxu0 0.0
        %1014 = vmatprep.subr.mxu0 0.0
        %1015 = vmatpush1.msra.mxu0 0.0
        %1016 = vmatprep.subr.mxu0 0.0
        %1017 = vmatpush1.msra.mxu0 0.0
        %1018 = vmatprep.subr.mxu0 0.0
        %1019 = vmatpush1.msra.mxu0 0.0
        %1020 = vmatprep.subr.mxu0 0.0
        %1021 = vmatpush1.msra.mxu0 0.0
        %1022 = vmatprep.subr.mxu0 0.0
        %1023 = vmatpush1.msra.mxu0 0.0
        %1024 = vmatprep.subr.mxu0 0.0
        %1025 = vmatpush1.msra.mxu0 0.0
        %1026 = vmatprep.subr.mxu0 0.0
        %1027 = vmatpush1.msra.mxu0 0.0
        %1028 = vmatprep.subr.mxu0 0.0
        %1029 = vmatpush1.msra.mxu0 0.0
        %1030 = vmatprep.subr.mxu0 0.0
        %1031 = vmatpush1.msra.mxu0 0.0
        %1032 = vmatprep.subr.mxu0 0.0
        %1033 = vmatpush1.msra.mxu0 0.0
        %1034 = vmatprep.subr.mxu0 0.0
        %1035 = vmatpush1.msra.mxu0 0.0
        %1036 = vmatprep.subr.mxu0 0.0
        %1037 = vmatpush1.msra.mxu0 0.0
        %1038 = vmatprep.subr.mxu0 0.0
        %1039 = vmatpush1.msra.mxu0 0.0
        %1040 = vmatprep.subr.mxu0 0.0
        %1041 = vmatpush1.msra.mxu0 0.0
        %1042 = vmatprep.subr.mxu0 0.0
        %1043 = vmatpush1.msra.mxu0 0.0
        %1044 = vmatprep.subr.mxu0 0.0
        %1045 = vmatpush1.msra.mxu0 0.0
        %1046 = vmatprep.subr.mxu0 0.0
        %1047 = vmatpush1.msra.mxu0 0.0
        %1048 = vmatprep.subr.mxu0 0.0
        %1049 = vmatpush1.msra.mxu0 0.0
        %1050 = vmatprep.subr.mxu0 0.0
        %1051 = vmatpush1.msra.mxu0 0.0
        %1052 = vmatprep.subr.mxu0 0.0
        %1053 = vmatpush1.msra.mxu0 0.0
        %1054 = vmatprep.subr.mxu0 0.0
        %1055 = vmatpush1.msra.mxu0 0.0
        %1056 = vmatprep.subr.mxu0 0.0
        %1057 = vmatpush1.msra.mxu0 0.0
        %1058 = vmatprep.subr.mxu0 0.0
        %1059 = vmatpush1.msra.mxu0 0.0
        %1060 = vmatprep.subr.mxu0 0.0
        %1061 = vmatpush1.msra.mxu0 0.0
        %1062 = vmatprep.mubr.f32.mxu0 0.0
        %1063 = vmatmul.mubr.f32.gmra.mrb[0].mxu0 %v987
        %v1064 = vpop.f32.mrb[0].mxu0
        %v1065 = vadd.f32 0.0, %v1064
        %v1066 = vpop.f32.mrb[0].mxu0
        %1067 = vmatprep.mubr.f32.mxu0 0.0
        %1068 = vmatmul.mubr.f32.gmra.mrb[0].mxu0 %v990
        %v1069 = vpop.f32.mrb[0].mxu0
        %v1070 = vadd.f32 0.0, %v1069
        %v1071 = vpop.f32.mrb[0].mxu0
        %1072 = vmatprep.mubr.f32.mxu0 0.0
        %1073 = vmatmul.mubr.f32.gmra.mrb[0].mxu0 %v993
        %v1074 = vpop.f32.mrb[0].mxu0
        %v1075 = vadd.f32 0.0, %v1074
        %v1076 = vpop.f32.mrb[0].mxu0
        %1077 = vmatprep.mubr.f32.mxu0 0.0
        %1078 = vmatmul.mubr.f32.gmra.mrb[0].mxu0 %v996
        %v1079 = vpop.f32.mrb[0].mxu0
        %v1080 = vadd.f32 0.0, %v1079
        %v1081 = vpop.f32.mrb[0].mxu0
        %1082 = vdwg.mxu0
        %v1084 = vlaneseq
        %v1085 = vshrl.u32 %v1084, 7
        %v1086 = vsub.s32 0, %v1085
        %v1087 = vrot.slane %v984, %v1086
        %v1089 = vmul.f32 %v1065, %v1087
        %v1090 = vmul.f32 %v1070, %v1087
        %v1091 = vmul.f32 %v1075, %v1087
        %v1092 = vmul.f32 %v1080, %v1087
        %v1093 = vld [vmem:[%s13] sm:$0xff]
        %v1094 = vsel %vm887, %v745, 0
        %v1096 = vsel %vm887, %v746, 0
        %v1098 = vsel %vm887, %v747, 0
        %v1100 = vsel %vm887, %v748, 0
        %1102 = vmatprep.subr.mxu0 0.0
        %1103 = vmatpush1.msra.mxu0 %v1093
        %1104 = vmatprep.subr.mxu0 0.0
        %1105 = vmatpush1.msra.mxu0 0.0
        %1106 = vmatprep.subr.mxu0 0.0
        %1107 = vmatpush1.msra.mxu0 0.0
        %1108 = vmatprep.subr.mxu0 0.0
        %1109 = vmatpush1.msra.mxu0 0.0
        %1110 = vmatprep.subr.mxu0 0.0
        %1111 = vmatpush1.msra.mxu0 0.0
        %1112 = vmatprep.subr.mxu0 0.0
        %1113 = vmatpush1.msra.mxu0 0.0
        %1114 = vmatprep.subr.mxu0 0.0
        %1115 = vmatpush1.msra.mxu0 0.0
        %1116 = vmatprep.subr.mxu0 0.0
        %1117 = vmatpush1.msra.mxu0 0.0
        %1118 = vmatprep.subr.mxu0 0.0
        %1119 = vmatpush1.msra.mxu0 0.0
        %1120 = vmatprep.subr.mxu0 0.0
        %1121 = vmatpush1.msra.mxu0 0.0
        %1122 = vmatprep.subr.mxu0 0.0
        %1123 = vmatpush1.msra.mxu0 0.0
        %1124 = vmatprep.subr.mxu0 0.0
        %1125 = vmatpush1.msra.mxu0 0.0
        %1126 = vmatprep.subr.mxu0 0.0
        %1127 = vmatpush1.msra.mxu0 0.0
        %1128 = vmatprep.subr.mxu0 0.0
        %1129 = vmatpush1.msra.mxu0 0.0
        %1130 = vmatprep.subr.mxu0 0.0
        %1131 = vmatpush1.msra.mxu0 0.0
        %1132 = vmatprep.subr.mxu0 0.0
        %1133 = vmatpush1.msra.mxu0 0.0
        %1134 = vmatprep.subr.mxu0 0.0
        %1135 = vmatpush1.msra.mxu0 0.0
        %1136 = vmatprep.subr.mxu0 0.0
        %1137 = vmatpush1.msra.mxu0 0.0
        %1138 = vmatprep.subr.mxu0 0.0
        %1139 = vmatpush1.msra.mxu0 0.0
        %1140 = vmatprep.subr.mxu0 0.0
        %1141 = vmatpush1.msra.mxu0 0.0
        %1142 = vmatprep.subr.mxu0 0.0
        %1143 = vmatpush1.msra.mxu0 0.0
        %1144 = vmatprep.subr.mxu0 0.0
        %1145 = vmatpush1.msra.mxu0 0.0
        %1146 = vmatprep.subr.mxu0 0.0
        %1147 = vmatpush1.msra.mxu0 0.0
        %1148 = vmatprep.subr.mxu0 0.0
        %1149 = vmatpush1.msra.mxu0 0.0
        %1150 = vmatprep.subr.mxu0 0.0
        %1151 = vmatpush1.msra.mxu0 0.0
        %1152 = vmatprep.subr.mxu0 0.0
        %1153 = vmatpush1.msra.mxu0 0.0
        %1154 = vmatprep.subr.mxu0 0.0
        %1155 = vmatpush1.msra.mxu0 0.0
        %1156 = vmatprep.subr.mxu0 0.0
        %1157 = vmatpush1.msra.mxu0 0.0
        %1158 = vmatprep.subr.mxu0 0.0
        %1159 = vmatpush1.msra.mxu0 0.0
        %1160 = vmatprep.subr.mxu0 0.0
        %1161 = vmatpush1.msra.mxu0 0.0
        %1162 = vmatprep.subr.mxu0 0.0
        %1163 = vmatpush1.msra.mxu0 0.0
        %1164 = vmatprep.subr.mxu0 0.0
        %1165 = vmatpush1.msra.mxu0 0.0
        %1166 = vmatprep.mubr.f32.mxu0 0.0
        %1167 = vmatmul.mubr.f32.gmra.mrb[0].mxu0 %v1094
        %v1168 = vpop.f32.mrb[0].mxu0
        %v1169 = vadd.f32 0.0, %v1168
        %v1170 = vpop.f32.mrb[0].mxu0
        %1171 = vmatprep.mubr.f32.mxu0 0.0
        %1172 = vmatmul.mubr.f32.gmra.mrb[0].mxu0 %v1096
        %v1173 = vpop.f32.mrb[0].mxu0
        %v1174 = vadd.f32 0.0, %v1173
        %v1175 = vpop.f32.mrb[0].mxu0
        %1176 = vmatprep.mubr.f32.mxu0 0.0
        %1177 = vmatmul.mubr.f32.gmra.mrb[0].mxu0 %v1098
        %v1178 = vpop.f32.mrb[0].mxu0
        %v1179 = vadd.f32 0.0, %v1178
        %v1180 = vpop.f32.mrb[0].mxu0
        %1181 = vmatprep.mubr.f32.mxu0 0.0
        %1182 = vmatmul.mubr.f32.gmra.mrb[0].mxu0 %v1100
        %v1183 = vpop.f32.mrb[0].mxu0
        %v1184 = vadd.f32 0.0, %v1183
        %v1185 = vpop.f32.mrb[0].mxu0
        %1186 = vdwg.mxu0
        %v1187 = vadd.f32 %v1089, %v1169
        %v1188 = vadd.f32 %v1090, %v1174
        %v1189 = vadd.f32 %v1091, %v1179
        %v1190 = vadd.f32 %v1092, %v1184
        %v1191 = vld [vmem:[%s10] sm:$0xff]
        %v1192 = vld [vmem:[%s10 + $0x8] sm:$0xff]
        %v1193 = vld [vmem:[%s10 + $0x10] sm:$0xff]
        %v1194 = vld [vmem:[%s10 + $0x18] sm:$0xff]
        %1199 = vrot.lane.b32.xlu0 %v1187, 1
        %v1200 = vpop.permute.xlu0 %1199
        %1201 = vrot.lane.b32.xlu0 %v1188, 1
        %v1202 = vpop.permute.xlu0 %1201
        %1203 = vrot.lane.b32.xlu0 %v1189, 1
        %v1204 = vpop.permute.xlu0 %1203
        %1205 = vrot.lane.b32.xlu0 %v1190, 1
        %v1206 = vpop.permute.xlu0 %1205
        %v1211 = vsel %vm769, 0.0, %v1200
        %v1212 = vsel %vm769, 0.0, %v1202
        %v1213 = vsel %vm769, 0.0, %v1204
        %v1214 = vsel %vm769, 0.0, %v1206
        %1215 = vrot.lane.b32.xlu0 %v1187, 127
        %v1216 = vpop.permute.xlu0 %1215
        %1217 = vrot.lane.b32.xlu0 %v1188, 127
        %v1218 = vpop.permute.xlu0 %1217
        %1219 = vrot.lane.b32.xlu0 %v1189, 127
        %v1220 = vpop.permute.xlu0 %1219
        %1221 = vrot.lane.b32.xlu0 %v1190, 127
        %v1222 = vpop.permute.xlu0 %1221
        %vm1227 = vcmask 121856
        %v1228 = vsel %vm1227, %v1216, 0.0
        %v1229 = vsel %vm1227, %v1218, 0.0
        %v1230 = vsel %vm1227, %v1220, 0.0
        %v1231 = vsel %vm1227, %v1222, 0.0
        %1233 = vset.pattern.permute.xlu0 0
        %1234 = vperm.xlu0 %1233, %v1191
        %v1235 = vpop.permute.xlu0 %1234
        %1238 = vset.pattern.permute.xlu0 0
        %1239 = vperm.xlu0 %1238, %v1192
        %v1240 = vpop.permute.xlu0 %1239
        %1243 = vset.pattern.permute.xlu0 0
        %1244 = vperm.xlu0 %1243, %v1193
        %v1245 = vpop.permute.xlu0 %1244
        %1248 = vset.pattern.permute.xlu0 0
        %1249 = vperm.xlu0 %1248, %v1194
        %v1250 = vpop.permute.xlu0 %1249
        %v1252 = vmul.f32 %v1235, %v1211
        %v1253 = vmul.f32 %v1240, %v1212
        %v1254 = vmul.f32 %v1245, %v1213
        %v1255 = vmul.f32 %v1250, %v1214
        %1256 = vset.pattern.permute.xlu0 1
        %1257 = vperm.xlu0 %1256, %v1191
        %v1258 = vpop.permute.xlu0 %1257
        %1260 = vset.pattern.permute.xlu0 1
        %1261 = vperm.xlu0 %1260, %v1192
        %v1262 = vpop.permute.xlu0 %1261
        %1264 = vset.pattern.permute.xlu0 1
        %1265 = vperm.xlu0 %1264, %v1193
        %v1266 = vpop.permute.xlu0 %1265
        %1268 = vset.pattern.permute.xlu0 1
        %1269 = vperm.xlu0 %1268, %v1194
        %v1270 = vpop.permute.xlu0 %1269
        %v1272 = vmul.f32 %v1258, %v1187
        %v1273 = vmul.f32 %v1262, %v1188
        %v1274 = vmul.f32 %v1266, %v1189
        %v1275 = vmul.f32 %v1270, %v1190
        %v1276 = vadd.f32 %v1252, %v1272
        %v1277 = vadd.f32 %v1253, %v1273
        %v1278 = vadd.f32 %v1254, %v1274
        %v1279 = vadd.f32 %v1255, %v1275
        %1280 = vset.pattern.permute.xlu0 2
        %1281 = vperm.xlu0 %1280, %v1191
        %v1282 = vpop.permute.xlu0 %1281
        %1284 = vset.pattern.permute.xlu0 2
        %1285 = vperm.xlu0 %1284, %v1192
        %v1286 = vpop.permute.xlu0 %1285
        %1288 = vset.pattern.permute.xlu0 2
        %1289 = vperm.xlu0 %1288, %v1193
        %v1290 = vpop.permute.xlu0 %1289
        %1292 = vset.pattern.permute.xlu0 2
        %1293 = vperm.xlu0 %1292, %v1194
        %v1294 = vpop.permute.xlu0 %1293
        %v1296 = vmul.f32 %v1282, %v1228
        %v1297 = vmul.f32 %v1286, %v1229
        %v1298 = vmul.f32 %v1290, %v1230
        %v1299 = vmul.f32 %v1294, %v1231
        %v1300 = vadd.f32 %v1276, %v1296
        %v1301 = vadd.f32 %v1277, %v1297
        %v1302 = vadd.f32 %v1278, %v1298
        %v1303 = vadd.f32 %v1279, %v1299
        %1304 = vset.pattern.permute.xlu0 3
        %1305 = vperm.xlu0 %1304, %v1191
        %v1306 = vpop.permute.xlu0 %1305
        %1308 = vset.pattern.permute.xlu0 3
        %1309 = vperm.xlu0 %1308, %v1192
        %v1310 = vpop.permute.xlu0 %1309
        %1312 = vset.pattern.permute.xlu0 3
        %1313 = vperm.xlu0 %1312, %v1193
        %v1314 = vpop.permute.xlu0 %1313
        %1316 = vset.pattern.permute.xlu0 3
        %1317 = vperm.xlu0 %1316, %v1194
        %v1318 = vpop.permute.xlu0 %1317
        %v1320 = vadd.f32 %v1300, %v1306
        %v1321 = vadd.f32 %v1301, %v1310
        %v1322 = vadd.f32 %v1302, %v1314
        %v1323 = vadd.f32 %v1303, %v1318
        %v1324 = vmul.f32 %v1320, %v1087
        %v1325 = vmul.f32 %v1321, %v1087
        %v1326 = vmul.f32 %v1322, %v1087
        %v1327 = vmul.f32 %v1323, %v1087
        %vm1328 = vcmask 130048
        %v1329 = vsel %vm1328, %v1324, 0.0
        %v1330 = vsel %vm1328, %v1325, 0.0
        %v1331 = vadd.f32 %v1329, %v1330
        %v1332 = vsel %vm1328, %v1326, 0.0
        %v1333 = vadd.f32 %v1331, %v1332
        %v1334 = vsel %vm1328, %v1327, 0.0
        %v1335 = vadd.f32 %v1333, %v1334
        %v1336 = vrot.slane %v1335, 4
        %v1337 = vadd.f32 %v1335, %v1336
        %v1338 = vrot.slane %v1337, 2
        %v1339 = vadd.f32 %v1337, %v1338
        %v1340 = vrot.slane %v1339, 1
        %v1341 = vadd.f32 %v1339, %v1340
        %v1342 = vmul.f32 %v1341, %v901
        %v1343 = vsub.f32 %v1324, %v1342
        %v1344 = vsub.f32 %v1325, %v1342
        %v1345 = vsub.f32 %v1326, %v1342
        %v1346 = vsub.f32 %v1327, %v1342
        %v1347 = vmul.f32 %v1343, %v1343
        %v1348 = vmul.f32 %v1344, %v1344
        %v1349 = vmul.f32 %v1345, %v1345
        %v1350 = vmul.f32 %v1346, %v1346
        %v1351 = vsel %vm1328, %v1347, 0.0
        %v1352 = vsel %vm1328, %v1348, 0.0
        %v1353 = vadd.f32 %v1351, %v1352
        %v1354 = vsel %vm1328, %v1349, 0.0
        %v1355 = vadd.f32 %v1353, %v1354
        %v1356 = vsel %vm1328, %v1350, 0.0
        %v1357 = vadd.f32 %v1355, %v1356
        %v1358 = vrot.slane %v1357, 4
        %v1359 = vadd.f32 %v1357, %v1358
        %v1360 = vrot.slane %v1359, 2
        %v1361 = vadd.f32 %v1359, %v1360
        %v1362 = vrot.slane %v1361, 1
        %v1363 = vadd.f32 %v1361, %v1362
        %v1364 = vmul.f32 %v1363, %v901
        %v1365 = vadd.f32 %v1364, 1e-05
        %v1366 = vrsqrt.pop %v1365
        %v1367 = vmul.f32 %v1343, %v1366
        %v1368 = vmul.f32 %v1344, %v1366
        %v1369 = vmul.f32 %v1345, %v1366
        %v1370 = vmul.f32 %v1346, %v1366
        %1371 = vset.pattern.permute.xlu0 4
        %1372 = vperm.xlu0 %1371, %v1191
        %v1373 = vpop.permute.xlu0 %1372
        %1375 = vset.pattern.permute.xlu0 4
        %1376 = vperm.xlu0 %1375, %v1192
        %v1377 = vpop.permute.xlu0 %1376
        %1379 = vset.pattern.permute.xlu0 4
        %1380 = vperm.xlu0 %1379, %v1193
        %v1381 = vpop.permute.xlu0 %1380
        %1383 = vset.pattern.permute.xlu0 4
        %1384 = vperm.xlu0 %1383, %v1194
        %v1385 = vpop.permute.xlu0 %1384
        %v1387 = vmul.f32 %v1367, %v1373
        %v1388 = vmul.f32 %v1368, %v1377
        %v1389 = vmul.f32 %v1369, %v1381
        %v1390 = vmul.f32 %v1370, %v1385
        %1391 = vset.pattern.permute.xlu0 5
        %1392 = vperm.xlu0 %1391, %v1191
        %v1393 = vpop.permute.xlu0 %1392
        %1395 = vset.pattern.permute.xlu0 5
        %1396 = vperm.xlu0 %1395, %v1192
        %v1397 = vpop.permute.xlu0 %1396
        %1399 = vset.pattern.permute.xlu0 5
        %1400 = vperm.xlu0 %1399, %v1193
        %v1401 = vpop.permute.xlu0 %1400
        %1403 = vset.pattern.permute.xlu0 5
        %1404 = vperm.xlu0 %1403, %v1194
        %v1405 = vpop.permute.xlu0 %1404
        %v1407 = vadd.f32 %v1387, %v1393
        %v1408 = vadd.f32 %v1388, %v1397
        %v1409 = vadd.f32 %v1389, %v1401
        %v1410 = vadd.f32 %v1390, %v1405
        %1411 = vst.msk [vmem:[%s621] sm:$0xff] %vm1328, %v1407
        %1412 = vst.msk [vmem:[%s621 + $0x8] sm:$0xff] %vm1328, %v1408
        %1413 = vst.msk [vmem:[%s621 + $0x10] sm:$0xff] %vm1328, %v1409
        %1414 = vst.msk [vmem:[%s621 + $0x18] sm:$0xff] %vm1328, %v1410
        %v1415 = vld [vmem:[%s597] sm:$0xff]
        %v1416 = vld [vmem:[%s597 + $0x8] sm:$0xff]
        %v1417 = vld [vmem:[%s6] sm:$0xff]
        %v1418 = vld [vmem:[%s6 + $0x8] sm:$0xff]
        %v1419 = vld [vmem:[%s6 + $0x10] sm:$0xff]
        %v1420 = vld [vmem:[%s6 + $0x18] sm:$0xff]
        %v1421 = vld [vmem:[%s610] sm:$0x1]
        %v1422 = vsub.f32 1.0, %v1421
        %v1424 = vsel %vm1328, %v1417, 0
        %v1427 = vsel %vm1328, %v1418, 0
        %v1430 = vsel %vm1328, %v1419, 0
        %v1433 = vsel %vm1328, %v1420, 0
        %1435 = vmatprep.subr.mxu0 0.0
        %1436 = vmatpush1.msra.mxu0 %v1415
        %1437 = vmatprep.subr.mxu0 0.0
        %1438 = vmatpush1.msra.mxu0 %v1416
        %1439 = vmatprep.subr.mxu0 0.0
        %1440 = vmatpush1.msra.mxu0 0.0
        %1441 = vmatprep.subr.mxu0 0.0
        %1442 = vmatpush1.msra.mxu0 0.0
        %1443 = vmatprep.subr.mxu0 0.0
        %1444 = vmatpush1.msra.mxu0 0.0
        %1445 = vmatprep.subr.mxu0 0.0
        %1446 = vmatpush1.msra.mxu0 0.0
        %1447 = vmatprep.subr.mxu0 0.0
        %1448 = vmatpush1.msra.mxu0 0.0
        %1449 = vmatprep.subr.mxu0 0.0
        %1450 = vmatpush1.msra.mxu0 0.0
        %1451 = vmatprep.subr.mxu0 0.0
        %1452 = vmatpush1.msra.mxu0 0.0
        %1453 = vmatprep.subr.mxu0 0.0
        %1454 = vmatpush1.msra.mxu0 0.0
        %1455 = vmatprep.subr.mxu0 0.0
        %1456 = vmatpush1.msra.mxu0 0.0
        %1457 = vmatprep.subr.mxu0 0.0
        %1458 = vmatpush1.msra.mxu0 0.0
        %1459 = vmatprep.subr.mxu0 0.0
        %1460 = vmatpush1.msra.mxu0 0.0
        %1461 = vmatprep.subr.mxu0 0.0
        %1462 = vmatpush1.msra.mxu0 0.0
        %1463 = vmatprep.subr.mxu0 0.0
        %1464 = vmatpush1.msra.mxu0 0.0
        %1465 = vmatprep.subr.mxu0 0.0
        %1466 = vmatpush1.msra.mxu0 0.0
        %1467 = vmatprep.subr.mxu0 0.0
        %1468 = vmatpush1.msra.mxu0 0.0
        %1469 = vmatprep.subr.mxu0 0.0
        %1470 = vmatpush1.msra.mxu0 0.0
        %1471 = vmatprep.subr.mxu0 0.0
        %1472 = vmatpush1.msra.mxu0 0.0
        %1473 = vmatprep.subr.mxu0 0.0
        %1474 = vmatpush1.msra.mxu0 0.0
        %1475 = vmatprep.subr.mxu0 0.0
        %1476 = vmatpush1.msra.mxu0 0.0
        %1477 = vmatprep.subr.mxu0 0.0
        %1478 = vmatpush1.msra.mxu0 0.0
        %1479 = vmatprep.subr.mxu0 0.0
        %1480 = vmatpush1.msra.mxu0 0.0
        %1481 = vmatprep.subr.mxu0 0.0
        %1482 = vmatpush1.msra.mxu0 0.0
        %1483 = vmatprep.subr.mxu0 0.0
        %1484 = vmatpush1.msra.mxu0 0.0
        %1485 = vmatprep.subr.mxu0 0.0
        %1486 = vmatpush1.msra.mxu0 0.0
        %1487 = vmatprep.subr.mxu0 0.0
        %1488 = vmatpush1.msra.mxu0 0.0
        %1489 = vmatprep.subr.mxu0 0.0
        %1490 = vmatpush1.msra.mxu0 0.0
        %1491 = vmatprep.subr.mxu0 0.0
        %1492 = vmatpush1.msra.mxu0 0.0
        %1493 = vmatprep.subr.mxu0 0.0
        %1494 = vmatpush1.msra.mxu0 0.0
        %1495 = vmatprep.subr.mxu0 0.0
        %1496 = vmatpush1.msra.mxu0 0.0
        %1497 = vmatprep.subr.mxu0 0.0
        %1498 = vmatpush1.msra.mxu0 0.0
        %1499 = vmatprep.mubr.f32.mxu0 0.0
        %1500 = vmatmul.mubr.f32.gmra.mrb[0].mxu0 %v1424
        %v1501 = vpop.f32.mrb[0].mxu0
        %v1502 = vadd.f32 0.0, %v1501
        %v1503 = vpop.f32.mrb[0].mxu0
        %1504 = vmatprep.mubr.f32.mxu0 0.0
        %1505 = vmatmul.mubr.f32.gmra.mrb[0].mxu0 %v1427
        %v1506 = vpop.f32.mrb[0].mxu0
        %v1507 = vadd.f32 0.0, %v1506
        %v1508 = vpop.f32.mrb[0].mxu0
        %1509 = vmatprep.mubr.f32.mxu0 0.0
        %1510 = vmatmul.mubr.f32.gmra.mrb[0].mxu0 %v1430
        %v1511 = vpop.f32.mrb[0].mxu0
        %v1512 = vadd.f32 0.0, %v1511
        %v1513 = vpop.f32.mrb[0].mxu0
        %1514 = vmatprep.mubr.f32.mxu0 0.0
        %1515 = vmatmul.mubr.f32.gmra.mrb[0].mxu0 %v1433
        %v1516 = vpop.f32.mrb[0].mxu0
        %v1517 = vadd.f32 0.0, %v1516
        %v1518 = vpop.f32.mrb[0].mxu0
        %1519 = vdwg.mxu0
        %v1521 = vlaneseq
        %v1522 = vshrl.u32 %v1521, 7
        %v1523 = vsub.s32 0, %v1522
        %v1524 = vrot.slane %v1422, %v1523
        %v1526 = vmul.f32 %v1502, %v1524
        %v1527 = vmul.f32 %v1507, %v1524
        %v1528 = vmul.f32 %v1512, %v1524
        %v1529 = vmul.f32 %v1517, %v1524
        %v1530 = vld [vmem:[%s12] sm:$0xff]
        %v1531 = vld [vmem:[%s12 + $0x8] sm:$0xff]
        %v1532 = vsel %vm1328, %v1187, 0
        %v1534 = vsel %vm1328, %v1188, 0
        %v1536 = vsel %vm1328, %v1189, 0
        %v1538 = vsel %vm1328, %v1190, 0
        %1540 = vmatprep.subr.mxu0 0.0
        %1541 = vmatpush1.msra.mxu0 %v1530
        %1542 = vmatprep.subr.mxu0 0.0
        %1543 = vmatpush1.msra.mxu0 %v1531
        %1544 = vmatprep.subr.mxu0 0.0
        %1545 = vmatpush1.msra.mxu0 0.0
        %1546 = vmatprep.subr.mxu0 0.0
        %1547 = vmatpush1.msra.mxu0 0.0
        %1548 = vmatprep.subr.mxu0 0.0
        %1549 = vmatpush1.msra.mxu0 0.0
        %1550 = vmatprep.subr.mxu0 0.0
        %1551 = vmatpush1.msra.mxu0 0.0
        %1552 = vmatprep.subr.mxu0 0.0
        %1553 = vmatpush1.msra.mxu0 0.0
        %1554 = vmatprep.subr.mxu0 0.0
        %1555 = vmatpush1.msra.mxu0 0.0
        %1556 = vmatprep.subr.mxu0 0.0
        %1557 = vmatpush1.msra.mxu0 0.0
        %1558 = vmatprep.subr.mxu0 0.0
        %1559 = vmatpush1.msra.mxu0 0.0
        %1560 = vmatprep.subr.mxu0 0.0
        %1561 = vmatpush1.msra.mxu0 0.0
        %1562 = vmatprep.subr.mxu0 0.0
        %1563 = vmatpush1.msra.mxu0 0.0
        %1564 = vmatprep.subr.mxu0 0.0
        %1565 = vmatpush1.msra.mxu0 0.0
        %1566 = vmatprep.subr.mxu0 0.0
        %1567 = vmatpush1.msra.mxu0 0.0
        %1568 = vmatprep.subr.mxu0 0.0
        %1569 = vmatpush1.msra.mxu0 0.0
        %1570 = vmatprep.subr.mxu0 0.0
        %1571 = vmatpush1.msra.mxu0 0.0
        %1572 = vmatprep.subr.mxu0 0.0
        %1573 = vmatpush1.msra.mxu0 0.0
        %1574 = vmatprep.subr.mxu0 0.0
        %1575 = vmatpush1.msra.mxu0 0.0
        %1576 = vmatprep.subr.mxu0 0.0
        %1577 = vmatpush1.msra.mxu0 0.0
        %1578 = vmatprep.subr.mxu0 0.0
        %1579 = vmatpush1.msra.mxu0 0.0
        %1580 = vmatprep.subr.mxu0 0.0
        %1581 = vmatpush1.msra.mxu0 0.0
        %1582 = vmatprep.subr.mxu0 0.0
        %1583 = vmatpush1.msra.mxu0 0.0
        %1584 = vmatprep.subr.mxu0 0.0
        %1585 = vmatpush1.msra.mxu0 0.0
        %1586 = vmatprep.subr.mxu0 0.0
        %1587 = vmatpush1.msra.mxu0 0.0
        %1588 = vmatprep.subr.mxu0 0.0
        %1589 = vmatpush1.msra.mxu0 0.0
        %1590 = vmatprep.subr.mxu0 0.0
        %1591 = vmatpush1.msra.mxu0 0.0
        %1592 = vmatprep.subr.mxu0 0.0
        %1593 = vmatpush1.msra.mxu0 0.0
        %1594 = vmatprep.subr.mxu0 0.0
        %1595 = vmatpush1.msra.mxu0 0.0
        %1596 = vmatprep.subr.mxu0 0.0
        %1597 = vmatpush1.msra.mxu0 0.0
        %1598 = vmatprep.subr.mxu0 0.0
        %1599 = vmatpush1.msra.mxu0 0.0
        %1600 = vmatprep.subr.mxu0 0.0
        %1601 = vmatpush1.msra.mxu0 0.0
        %1602 = vmatprep.subr.mxu0 0.0
        %1603 = vmatpush1.msra.mxu0 0.0
        %1604 = vmatprep.mubr.f32.mxu0 0.0
        %1605 = vmatmul.mubr.f32.gmra.mrb[0].mxu0 %v1532
        %v1606 = vpop.f32.mrb[0].mxu0
        %v1607 = vadd.f32 0.0, %v1606
        %v1608 = vpop.f32.mrb[0].mxu0
        %1609 = vmatprep.mubr.f32.mxu0 0.0
        %1610 = vmatmul.mubr.f32.gmra.mrb[0].mxu0 %v1534
        %v1611 = vpop.f32.mrb[0].mxu0
        %v1612 = vadd.f32 0.0, %v1611
        %v1613 = vpop.f32.mrb[0].mxu0
        %1614 = vmatprep.mubr.f32.mxu0 0.0
        %1615 = vmatmul.mubr.f32.gmra.mrb[0].mxu0 %v1536
        %v1616 = vpop.f32.mrb[0].mxu0
        %v1617 = vadd.f32 0.0, %v1616
        %v1618 = vpop.f32.mrb[0].mxu0
        %1619 = vmatprep.mubr.f32.mxu0 0.0
        %1620 = vmatmul.mubr.f32.gmra.mrb[0].mxu0 %v1538
        %v1621 = vpop.f32.mrb[0].mxu0
        %v1622 = vadd.f32 0.0, %v1621
        %v1623 = vpop.f32.mrb[0].mxu0
        %1624 = vdwg.mxu0
        %v1625 = vadd.f32 %v1526, %v1607
        %v1626 = vadd.f32 %v1527, %v1612
        %v1627 = vadd.f32 %v1528, %v1617
        %v1628 = vadd.f32 %v1529, %v1622
        %v1629 = vld [vmem:[%s9] sm:$0xff]
        %v1630 = vld [vmem:[%s9 + $0x8] sm:$0xff]
        %v1631 = vld [vmem:[%s9 + $0x10] sm:$0xff]
        %v1632 = vld [vmem:[%s9 + $0x18] sm:$0xff]
        %1637 = vrot.lane.b32.xlu0 %v1625, 1
        %v1638 = vpop.permute.xlu0 %1637
        %1639 = vrot.lane.b32.xlu0 %v1626, 1
        %v1640 = vpop.permute.xlu0 %1639
        %1641 = vrot.lane.b32.xlu0 %v1627, 1
        %v1642 = vpop.permute.xlu0 %1641
        %1643 = vrot.lane.b32.xlu0 %v1628, 1
        %v1644 = vpop.permute.xlu0 %1643
        %v1649 = vsel %vm769, 0.0, %v1638
        %v1650 = vsel %vm769, 0.0, %v1640
        %v1651 = vsel %vm769, 0.0, %v1642
        %v1652 = vsel %vm769, 0.0, %v1644
        %1653 = vrot.lane.b32.xlu0 %v1625, 127
        %v1654 = vpop.permute.xlu0 %1653
        %1655 = vrot.lane.b32.xlu0 %v1626, 127
        %v1656 = vpop.permute.xlu0 %1655
        %1657 = vrot.lane.b32.xlu0 %v1627, 127
        %v1658 = vpop.permute.xlu0 %1657
        %1659 = vrot.lane.b32.xlu0 %v1628, 127
        %v1660 = vpop.permute.xlu0 %1659
        %vm1665 = vcmask 252928
        %v1666 = vsel %vm1665, %v1654, 0.0
        %v1667 = vsel %vm1665, %v1656, 0.0
        %v1668 = vsel %vm1665, %v1658, 0.0
        %v1669 = vsel %vm1665, %v1660, 0.0
        %1671 = vset.pattern.permute.xlu0 0
        %1672 = vperm.xlu0 %1671, %v1629
        %v1673 = vpop.permute.xlu0 %1672
        %1676 = vset.pattern.permute.xlu0 0
        %1677 = vperm.xlu0 %1676, %v1630
        %v1678 = vpop.permute.xlu0 %1677
        %1681 = vset.pattern.permute.xlu0 0
        %1682 = vperm.xlu0 %1681, %v1631
        %v1683 = vpop.permute.xlu0 %1682
        %1686 = vset.pattern.permute.xlu0 0
        %1687 = vperm.xlu0 %1686, %v1632
        %v1688 = vpop.permute.xlu0 %1687
        %v1690 = vmul.f32 %v1673, %v1649
        %v1691 = vmul.f32 %v1678, %v1650
        %v1692 = vmul.f32 %v1683, %v1651
        %v1693 = vmul.f32 %v1688, %v1652
        %1694 = vset.pattern.permute.xlu0 1
        %1695 = vperm.xlu0 %1694, %v1629
        %v1696 = vpop.permute.xlu0 %1695
        %1698 = vset.pattern.permute.xlu0 1
        %1699 = vperm.xlu0 %1698, %v1630
        %v1700 = vpop.permute.xlu0 %1699
        %1702 = vset.pattern.permute.xlu0 1
        %1703 = vperm.xlu0 %1702, %v1631
        %v1704 = vpop.permute.xlu0 %1703
        %1706 = vset.pattern.permute.xlu0 1
        %1707 = vperm.xlu0 %1706, %v1632
        %v1708 = vpop.permute.xlu0 %1707
        %v1710 = vmul.f32 %v1696, %v1625
        %v1711 = vmul.f32 %v1700, %v1626
        %v1712 = vmul.f32 %v1704, %v1627
        %v1713 = vmul.f32 %v1708, %v1628
        %v1714 = vadd.f32 %v1690, %v1710
        %v1715 = vadd.f32 %v1691, %v1711
        %v1716 = vadd.f32 %v1692, %v1712
        %v1717 = vadd.f32 %v1693, %v1713
        %1718 = vset.pattern.permute.xlu0 2
        %1719 = vperm.xlu0 %1718, %v1629
        %v1720 = vpop.permute.xlu0 %1719
        %1722 = vset.pattern.permute.xlu0 2
        %1723 = vperm.xlu0 %1722, %v1630
        %v1724 = vpop.permute.xlu0 %1723
        %1726 = vset.pattern.permute.xlu0 2
        %1727 = vperm.xlu0 %1726, %v1631
        %v1728 = vpop.permute.xlu0 %1727
        %1730 = vset.pattern.permute.xlu0 2
        %1731 = vperm.xlu0 %1730, %v1632
        %v1732 = vpop.permute.xlu0 %1731
        %v1734 = vmul.f32 %v1720, %v1666
        %v1735 = vmul.f32 %v1724, %v1667
        %v1736 = vmul.f32 %v1728, %v1668
        %v1737 = vmul.f32 %v1732, %v1669
        %v1738 = vadd.f32 %v1714, %v1734
        %v1739 = vadd.f32 %v1715, %v1735
        %v1740 = vadd.f32 %v1716, %v1736
        %v1741 = vadd.f32 %v1717, %v1737
        %1742 = vset.pattern.permute.xlu0 3
        %1743 = vperm.xlu0 %1742, %v1629
        %v1744 = vpop.permute.xlu0 %1743
        %1746 = vset.pattern.permute.xlu0 3
        %1747 = vperm.xlu0 %1746, %v1630
        %v1748 = vpop.permute.xlu0 %1747
        %1750 = vset.pattern.permute.xlu0 3
        %1751 = vperm.xlu0 %1750, %v1631
        %v1752 = vpop.permute.xlu0 %1751
        %1754 = vset.pattern.permute.xlu0 3
        %1755 = vperm.xlu0 %1754, %v1632
        %v1756 = vpop.permute.xlu0 %1755
        %v1758 = vadd.f32 %v1738, %v1744
        %v1759 = vadd.f32 %v1739, %v1748
        %v1760 = vadd.f32 %v1740, %v1752
        %v1761 = vadd.f32 %v1741, %v1756
        %v1762 = vmul.f32 %v1758, %v1524
        %v1763 = vmul.f32 %v1759, %v1524
        %v1764 = vmul.f32 %v1760, %v1524
        %v1765 = vmul.f32 %v1761, %v1524
        %v1766 = vsel %vm985, %v1762, 0.0
        %v1767 = vsel %vm985, %v1763, 0.0
        %v1768 = vadd.f32 %v1766, %v1767
        %v1769 = vsel %vm985, %v1764, 0.0
        %v1770 = vadd.f32 %v1768, %v1769
        %v1771 = vsel %vm985, %v1765, 0.0
        %v1772 = vadd.f32 %v1770, %v1771
        %v1773 = vrot.slane %v1772, 4
        %v1774 = vadd.f32 %v1772, %v1773
        %v1775 = vrot.slane %v1774, 2
        %v1776 = vadd.f32 %v1774, %v1775
        %v1777 = vrot.slane %v1776, 1
        %v1778 = vadd.f32 %v1776, %v1777
        %v1779 = vmul.f32 %v1778, %v901
        %v1780 = vsub.f32 %v1762, %v1779
        %v1781 = vsub.f32 %v1763, %v1779
        %v1782 = vsub.f32 %v1764, %v1779
        %v1783 = vsub.f32 %v1765, %v1779
        %v1784 = vmul.f32 %v1780, %v1780
        %v1785 = vmul.f32 %v1781, %v1781
        %v1786 = vmul.f32 %v1782, %v1782
        %v1787 = vmul.f32 %v1783, %v1783
        %v1788 = vsel %vm985, %v1784, 0.0
        %v1789 = vsel %vm985, %v1785, 0.0
        %v1790 = vadd.f32 %v1788, %v1789
        %v1791 = vsel %vm985, %v1786, 0.0
        %v1792 = vadd.f32 %v1790, %v1791
        %v1793 = vsel %vm985, %v1787, 0.0
        %v1794 = vadd.f32 %v1792, %v1793
        %v1795 = vrot.slane %v1794, 4
        %v1796 = vadd.f32 %v1794, %v1795
        %v1797 = vrot.slane %v1796, 2
        %v1798 = vadd.f32 %v1796, %v1797
        %v1799 = vrot.slane %v1798, 1
        %v1800 = vadd.f32 %v1798, %v1799
        %v1801 = vmul.f32 %v1800, %v901
        %v1802 = vadd.f32 %v1801, 1e-05
        %v1803 = vrsqrt.pop %v1802
        %v1804 = vmul.f32 %v1780, %v1803
        %v1805 = vmul.f32 %v1781, %v1803
        %v1806 = vmul.f32 %v1782, %v1803
        %v1807 = vmul.f32 %v1783, %v1803
        %1808 = vset.pattern.permute.xlu0 4
        %1809 = vperm.xlu0 %1808, %v1629
        %v1810 = vpop.permute.xlu0 %1809
        %1812 = vset.pattern.permute.xlu0 4
        %1813 = vperm.xlu0 %1812, %v1630
        %v1814 = vpop.permute.xlu0 %1813
        %1816 = vset.pattern.permute.xlu0 4
        %1817 = vperm.xlu0 %1816, %v1631
        %v1818 = vpop.permute.xlu0 %1817
        %1820 = vset.pattern.permute.xlu0 4
        %1821 = vperm.xlu0 %1820, %v1632
        %v1822 = vpop.permute.xlu0 %1821
        %v1824 = vmul.f32 %v1804, %v1810
        %v1825 = vmul.f32 %v1805, %v1814
        %v1826 = vmul.f32 %v1806, %v1818
        %v1827 = vmul.f32 %v1807, %v1822
        %1828 = vset.pattern.permute.xlu0 5
        %1829 = vperm.xlu0 %1828, %v1629
        %v1830 = vpop.permute.xlu0 %1829
        %1832 = vset.pattern.permute.xlu0 5
        %1833 = vperm.xlu0 %1832, %v1630
        %v1834 = vpop.permute.xlu0 %1833
        %1836 = vset.pattern.permute.xlu0 5
        %1837 = vperm.xlu0 %1836, %v1631
        %v1838 = vpop.permute.xlu0 %1837
        %1840 = vset.pattern.permute.xlu0 5
        %1841 = vperm.xlu0 %1840, %v1632
        %v1842 = vpop.permute.xlu0 %1841
        %v1844 = vadd.f32 %v1824, %v1830
        %v1845 = vadd.f32 %v1825, %v1834
        %v1846 = vadd.f32 %v1826, %v1838
        %v1847 = vadd.f32 %v1827, %v1842
        %1848 = vst.msk [vmem:[%s578] sm:$0xff] %vm985, %v1844
        %1849 = vst.msk [vmem:[%s578 + $0x8] sm:$0xff] %vm985, %v1845
        %1850 = vst.msk [vmem:[%s578 + $0x10] sm:$0xff] %vm985, %v1846
        %1851 = vst.msk [vmem:[%s578 + $0x18] sm:$0xff] %vm985, %v1847
        %s1852 = sand.u32 %s363, 1
        %s1853 = scalar_lea.sflag [#allocation3], %s1852
        %s1854 = sand.u32 %s363, 1
        %s1855 = smul.addr %s1854, 32
        %s1856 = scalar_lea.vmem [#allocation2], %s1855
        %p1857 = scmp.lt.s32.totalorder %s31, 1
        %s1858 = scalar_select %p1857, %s31, 1
        %s1859 = smul.addr %s1858, 4
        %s1860 = smul.addr %s1859, 8
        %s1861 = scalar_lea.vmem %s15, %s1860
        %p1862 = scmp.lt.s32.totalorder %s31, 1
        %s1863 = scalar_select %p1862, %s31, 1
        %s1864 = smul.addr %s1863, 4
        %s1865 = smul.addr %s1864, 8
        %s1866 = scalar_lea.vmem %s16, %s1865
        // Predicated region
        $region77: #{tpu_custom_call.1} parent=75 // pred_check
          %p1867 = pneg %p373
        $region78: #{tpu_custom_call.1} parent=75 // pred_check_branch
          %1869 = sbr.rel (%p1867) target = $region80
        $region79: #{tpu_custom_call.1} parent=75 // pred_region
          %s1871 = ssub.s32 512, 512
          %1872 = vsyncadd %s1853, %s1871
          %s1873 = smul.addr %s31, 4
          %s1874 = smul.addr %s1873, 128
          %s1875 = scalar_lea.hbm %s14, %s1874
          %s1876 = sshll.u32 %s1856, 4
          %s1877 = int_to_ptr.vmem [resolvable:$true] %s1876
          %1882 = dma.vmem_to_hbm [thread:$0]  %s1877, 512, %s1875, %s1853, 128, 128, 8
        $region80: #{tpu_custom_call.1} parent=75 // pred_fallthru
          _
        // Predicated region
        $region81: #{tpu_custom_call.1} parent=75 // pred_check
          %p1883 = pneg %p399
        $region82: #{tpu_custom_call.1} parent=75 // pred_check_branch
          %1885 = sbr.rel (%p1883) target = $region84
        $region83: #{tpu_custom_call.1} parent=75 // pred_region
          _
        $region84: #{tpu_custom_call.1} parent=75 // pred_fallthru
          _
        // Predicated region
        $region85: #{tpu_custom_call.1} parent=75 // pred_check
          %p1886 = pneg %p425
        $region86: #{tpu_custom_call.1} parent=75 // pred_check_branch
          %1888 = sbr.rel (%p1886) target = $region88
        $region87: #{tpu_custom_call.1} parent=75 // pred_region
          _
        $region88: #{tpu_custom_call.1} parent=75 // pred_fallthru
          _
      $region76: #{tpu_custom_call.1} parent=5 // pred_fallthru
        _
      %p1889 = scmp.le.s32.totalorder 2, %s26
      // Predicated region
      $region89: #{tpu_custom_call.1} parent=5 // pred_check
        %p1890 = pneg %p1889
      $region90: #{tpu_custom_call.1} parent=5 // pred_check_branch
        %1892 = sbr.rel (%p1890) target = $region92
      $region91: #{tpu_custom_call.1} parent=5 // pred_region
        %s1893 = ssub.s32 %s26, 2
        // Predicated region
        $region93: #{tpu_custom_call.1} parent=91 // pred_check
          %p1894 = pneg %p379
        $region94: #{tpu_custom_call.1} parent=91 // pred_check_branch
          %1896 = sbr.rel (%p1894) target = $region96
        $region95: #{tpu_custom_call.1} parent=91 // pred_region
          %s1897 = sand.u32 %s364, 1
          %s1898 = scalar_lea.sflag [#allocation3], %s1897
          %s1899 = sand.u32 %s364, 1
          %s1900 = smul.addr %s1899, 32
          %s1901 = scalar_lea.vmem [#allocation2], %s1900
          %1902 = dma.done %s1898, 512
        $region96: #{tpu_custom_call.1} parent=91 // pred_fallthru
          _
        // Predicated region
        $region97: #{tpu_custom_call.1} parent=91 // pred_check
          %p1903 = pneg %p405
        $region98: #{tpu_custom_call.1} parent=91 // pred_check_branch
          %1905 = sbr.rel (%p1903) target = $region100
        $region99: #{tpu_custom_call.1} parent=91 // pred_region
          %p1906 = scmp.lt.s32.totalorder %s32, 1
          %s1907 = scalar_select %p1906, %s32, 1
          %s1908 = smul.addr %s1907, 4
          %s1909 = smul.addr %s1908, 8
          %s1910 = scalar_lea.vmem %s15, %s1909
        $region100: #{tpu_custom_call.1} parent=91 // pred_fallthru
          _
        // Predicated region
        $region101: #{tpu_custom_call.1} parent=91 // pred_check
          %p1911 = pneg %p431
        $region102: #{tpu_custom_call.1} parent=91 // pred_check_branch
          %1913 = sbr.rel (%p1911) target = $region104
        $region103: #{tpu_custom_call.1} parent=91 // pred_region
          %p1914 = scmp.lt.s32.totalorder %s32, 1
          %s1915 = scalar_select %p1914, %s32, 1
          %s1916 = smul.addr %s1915, 4
          %s1917 = smul.addr %s1916, 8
          %s1918 = scalar_lea.vmem %s16, %s1917
        $region104: #{tpu_custom_call.1} parent=91 // pred_fallthru
          _
      $region92: #{tpu_custom_call.1} parent=5 // pred_fallthru
        _
    $region6: #{tpu_custom_call.1} parent=1 // loop_footer
      %s30 = sadd.s32 1, %s26
    $region7: #{tpu_custom_call.1} parent=1 // loop_footer_branch
      %25 = sbr.rel target = $region3
    $region8: #{tpu_custom_call.1} parent=1 // loop_exit
      _
    %1919 = vsyncpa [#allocation3], 1
    %s1920 = scalar_lea.sflag [#allocation3], 1
    %1921 = vsyncpa %s1920, 1

</llo_original>
